<compile_context>
chip_gen: v7x
topology: tpu7x:2x2x1
jax: 0.10.0
libtpu: 0.0.40
codegen_flags: <defaults>
</compile_context>

<pallas_src>
import math
from functools import partial

import jax
import jax.numpy as jnp
from jax import lax
from jax.experimental import pallas as pl
from jax.experimental.pallas import tpu as pltpu

_VMEM_LIMIT = 32 * 1024 * 1024   # safe scoped-VMEM request on v5e/v6e/v7x


# ------------------------------ tile helpers --------------------------------

def _sub_tile(n, cap=256):
    """Largest divisor of n that is a multiple of 8 and <= cap (else n itself)."""
    best = None
    t = 8
    while t <= min(cap, n):
        if n % t == 0:
            best = t
        t += 8
    return best if best is not None else n


def _lane_tile(n, cap=512):
    """Largest divisor of n that is a multiple of 128 and <= cap (else n itself)."""
    best = None
    t = 128
    while t <= min(cap, n):
        if n % t == 0:
            best = t
        t += 128
    return best if best is not None else n


# ------------------- fused LayerNorm + matmul (qkv proj) --------------------

def _ln_matmul_kernel(x_ref, g_ref, w_ref, o_ref):
    x = x_ref[...]                                       # (tm, E) f32
    mean = jnp.mean(x, axis=-1, keepdims=True)
    xc = x - mean
    var = jnp.mean(xc * xc, axis=-1, keepdims=True)
    xhat = xc * lax.rsqrt(var + 1e-5) * g_ref[...]       # f32 LN statistics
    o_ref[...] = jnp.dot(xhat.astype(jnp.bfloat16), w_ref[...],
                         preferred_element_type=jnp.float32).astype(o_ref.dtype)


def ln_matmul(x2d, ln_w, w):
    """bf16( LayerNorm(x2d)*ln_w @ w ), tiled over rows and output columns."""
    M, E = x2d.shape
    E2, N = w.shape
    assert E == E2
    tm, tn = _sub_tile(M), _lane_tile(N)
    return pl.pallas_call(
        _ln_matmul_kernel,
        out_shape=jax.ShapeDtypeStruct((M, N), jnp.bfloat16),
        grid=(M // tm, N // tn),
        in_specs=[pl.BlockSpec((tm, E), lambda i, j: (i, 0)),
                  pl.BlockSpec((1, E), lambda i, j: (0, 0)),
                  pl.BlockSpec((E, tn), lambda i, j: (0, j))],
        out_specs=pl.BlockSpec((tm, tn), lambda i, j: (i, j)),
        compiler_params=pltpu.CompilerParams(
            dimension_semantics=("parallel", "parallel"),
            vmem_limit_bytes=_VMEM_LIMIT),
    )(x2d, ln_w.reshape(1, E), w)


# ------------- fused LayerNorm + up/gate matmuls + SwiGLU (MLP up) ----------

def _ln_swiglu_kernel(x_ref, g_ref, wu_ref, wg_ref, o_ref):
    x = x_ref[...]                                       # (tm, E) f32
    mean = jnp.mean(x, axis=-1, keepdims=True)
    xc = x - mean
    var = jnp.mean(xc * xc, axis=-1, keepdims=True)
    xb = (xc * lax.rsqrt(var + 1e-5) * g_ref[...]).astype(jnp.bfloat16)
    up = jnp.dot(xb, wu_ref[...], preferred_element_type=jnp.float32)
    gate = jnp.dot(xb, wg_ref[...], preferred_element_type=jnp.float32)
    o_ref[...] = (up * (gate * jax.nn.sigmoid(gate))).astype(o_ref.dtype)


def ln_swiglu(x2d, ln_w, w_up, w_gate):
    M, E = x2d.shape
    F4 = w_up.shape[1]
    tm, tn = _sub_tile(M), _lane_tile(F4)
    return pl.pallas_call(
        _ln_swiglu_kernel,
        out_shape=jax.ShapeDtypeStruct((M, F4), jnp.bfloat16),
        grid=(M // tm, F4 // tn),
        in_specs=[pl.BlockSpec((tm, E), lambda i, j: (i, 0)),
                  pl.BlockSpec((1, E), lambda i, j: (0, 0)),
                  pl.BlockSpec((E, tn), lambda i, j: (0, j)),
                  pl.BlockSpec((E, tn), lambda i, j: (0, j))],
        out_specs=pl.BlockSpec((tm, tn), lambda i, j: (i, j)),
        compiler_params=pltpu.CompilerParams(
            dimension_semantics=("parallel", "parallel"),
            vmem_limit_bytes=_VMEM_LIMIT),
    )(x2d, ln_w.reshape(1, E), w_up, w_gate)


# ---------- K-tiled matmul with fused scaled-residual add (proj/down) -------

def _matmul_resid_kernel(y_ref, w_ref, r_ref, o_ref, acc_ref, *, scale):
    k = pl.program_id(2)

    @pl.when(k == 0)
    def _():
        acc_ref[...] = jnp.zeros_like(acc_ref)

    acc_ref[...] += jnp.dot(y_ref[...], w_ref[...],
                            preferred_element_type=jnp.float32)

    @pl.when(k == pl.num_programs(2) - 1)
    def _():
        o_ref[...] = r_ref[...] + scale * acc_ref[...]


def matmul_resid(y2d, w, resid2d, scale):
    """resid + scale * (y2d @ w); K-tiled with f32 VMEM accumulator."""
    M, K = y2d.shape
    K2, N = w.shape
    assert K == K2
    tm, tn, tk = _sub_tile(M), _lane_tile(N), _lane_tile(K)
    return pl.pallas_call(
        partial(_matmul_resid_kernel, scale=scale),
        out_shape=jax.ShapeDtypeStruct((M, N), jnp.float32),
        grid=(M // tm, N // tn, K // tk),
        in_specs=[pl.BlockSpec((tm, tk), lambda i, j, k: (i, k)),
                  pl.BlockSpec((tk, tn), lambda i, j, k: (k, j)),
                  pl.BlockSpec((tm, tn), lambda i, j, k: (i, j))],
        out_specs=pl.BlockSpec((tm, tn), lambda i, j, k: (i, j)),
        scratch_shapes=[pltpu.VMEM((tm, tn), jnp.float32)],
        compiler_params=pltpu.CompilerParams(
            dimension_semantics=("parallel", "parallel", "arbitrary"),
            vmem_limit_bytes=_VMEM_LIMIT),
    )(y2d, w, resid2d)


# --------- flash-style causal attention with fused RoPE / clip / scale ------
#
# q, k arrive with the head dim in "half" (de-interleaved) layout:
#   [e_0 .. e_{D/2-1} | o_0 .. o_{D/2-1}]  where (e_i, o_i) = (x[2i], x[2i+1]).
# QK^T is invariant under this fixed permutation, so the scores (and hence the
# attention output, which keeps v's original layout) match the reference.

def _flash_rope_attn_kernel(q_ref, k_ref, v_ref, cq_ref, sq_ref, ck_ref, sk_ref,
                            o_ref, qs_ref, m_sc, l_sc, acc_sc,
                            *, tq, tk, d2, scale):
    qi = pl.program_id(2)
    ki = pl.program_id(3)
    q_start = qi * tq
    k_start = ki * tk

    @pl.when(ki == 0)
    def _():
        m_sc[...] = jnp.full_like(m_sc, -1e30)
        l_sc[...] = jnp.zeros_like(l_sc)
        acc_sc[...] = jnp.zeros_like(acc_sc)
        # RoPE + clip + scale on the q tile, cached in VMEM for all kv tiles.
        q = q_ref[0, 0].astype(jnp.float32)              # (tq, D) half layout
        cq = cq_ref[...]                                  # (tq, D/2)
        sq = sq_ref[...]
        qe = q[:, :d2]
        qo = q[:, d2:]
        qe2 = qe * cq - qo * sq
        qo2 = qo * cq + qe2 * sq                          # matches reference quirk
        qs_ref[:, :d2] = jnp.clip(qe2, -100.0, 100.0) * scale
        qs_ref[:, d2:] = jnp.clip(qo2, -100.0, 100.0) * scale

    # Skip KV tiles that lie entirely above the causal diagonal.
    @pl.when(k_start <= q_start + (tq - 1))
    def _():
        # RoPE + clip the k tile on the fly (VPU work, hidden under MXU).
        k = k_ref[0, 0].astype(jnp.float32)               # (tk, D) half layout
        ck = ck_ref[...]
        sk = sk_ref[...]
        ke = k[:, :d2]
        ko = k[:, d2:]
        ke2 = ke * ck - ko * sk
        ko2 = ko * ck + ke2 * sk
        ke2 = jnp.clip(ke2, -100.0, 100.0).astype(jnp.bfloat16)
        ko2 = jnp.clip(ko2, -100.0, 100.0).astype(jnp.bfloat16)
        v = jnp.clip(v_ref[0, 0].astype(jnp.float32),
                     -100.0, 100.0).astype(jnp.bfloat16)  # (tk, D) original layout

        qe_s = qs_ref[:, :d2].astype(jnp.bfloat16)
        qo_s = qs_ref[:, d2:].astype(jnp.bfloat16)
        # score split over the two head-dim halves (avoids any lane concat)
        s = lax.dot_general(qe_s, ke2, (((1,), (1,)), ((), ())),
                            preferred_element_type=jnp.float32)
        s = s + lax.dot_general(qo_s, ko2, (((1,), (1,)), ((), ())),
                                preferred_element_type=jnp.float32)

        row = q_start + lax.broadcasted_iota(jnp.int32, (tq, tk), 0)
        col = k_start + lax.broadcasted_iota(jnp.int32, (tq, tk), 1)
        s = jnp.where(col <= row, s, -1e30)               # finite mask (no NaNs)

        m_prev = m_sc[...]
        m_new = jnp.maximum(m_prev, jnp.max(s, axis=-1, keepdims=True))
        alpha = jnp.exp(m_prev - m_new)
        p = jnp.exp(s - m_new)
        l_sc[...] = alpha * l_sc[...] + jnp.sum(p, axis=-1, keepdims=True)
        acc_sc[...] = alpha * acc_sc[...] + jnp.dot(
            p.astype(jnp.bfloat16), v, preferred_element_type=jnp.float32)
        m_sc[...] = m_new

    @pl.when(ki == pl.num_programs(3) - 1)
    def _():
        inv = pl.reciprocal(l_sc[...], approx=True)
        o_ref[0, 0] = (acc_sc[...] * inv).astype(o_ref.dtype)


def causal_flash_attention_rope(q, k, v, cos, sin, attn_scale):
    """q, k: (B,H,T,D) bf16 in half head-dim layout; v: (B,H,T,D) bf16 original.
    cos, sin: (T, D//2) f32. Returns (B,H,T,D) bf16 in v's layout."""
    B, H, T, D = q.shape
    d2 = D // 2
    tq = _sub_tile(T, 128)
    tk = _sub_tile(T, 128)
    q_spec = pl.BlockSpec((1, 1, tq, D), lambda b, h, qi, ki: (b, h, qi, 0))
    kv_spec = pl.BlockSpec((1, 1, tk, D), lambda b, h, qi, ki: (b, h, ki, 0))
    cq_spec = pl.BlockSpec((tq, d2), lambda b, h, qi, ki: (qi, 0))
    ck_spec = pl.BlockSpec((tk, d2), lambda b, h, qi, ki: (ki, 0))
    return pl.pallas_call(
        partial(_flash_rope_attn_kernel, tq=tq, tk=tk, d2=d2, scale=attn_scale),
        out_shape=jax.ShapeDtypeStruct((B, H, T, D), jnp.bfloat16),
        grid=(B, H, T // tq, T // tk),
        in_specs=[q_spec, kv_spec, kv_spec, cq_spec, cq_spec, ck_spec, ck_spec],
        out_specs=q_spec,
        scratch_shapes=[pltpu.VMEM((tq, D), jnp.float32),   # rope'd/scaled q cache
                        pltpu.VMEM((tq, 1), jnp.float32),   # m
                        pltpu.VMEM((tq, 1), jnp.float32),   # l
                        pltpu.VMEM((tq, D), jnp.float32)],  # acc
        compiler_params=pltpu.CompilerParams(
            dimension_semantics=("parallel", "parallel", "parallel", "arbitrary"),
            vmem_limit_bytes=_VMEM_LIMIT),
    )(q, k, v, cos, sin, cos, sin)


# -------------------- fused ln_f + tied lm_head (trans_b) -------------------

def _ln_head_kernel(x_ref, g_ref, wte_ref, o_ref):
    x = x_ref[...]                                       # (R, E) f32
    mean = jnp.mean(x, axis=-1, keepdims=True)
    xc = x - mean
    var = jnp.mean(xc * xc, axis=-1, keepdims=True)
    xb = (xc * lax.rsqrt(var + 1e-5) * g_ref[...]).astype(jnp.bfloat16)
    # contract against wte in its stored (V, E) layout -> no HBM transpose
    o_ref[...] = lax.dot_general(xb, wte_ref[...], (((1,), (1,)), ((), ())),
                                 preferred_element_type=jnp.float32)


def ln_lm_head(x_last, ln_w, wte):
    B, E = x_last.shape
    V = wte.shape[0]
    R = max(8, ((B + 7) // 8) * 8)                       # pad rows to sublane tile
    x_pad = jnp.zeros((R, E), jnp.float32).at[:B].set(x_last)
    tv = _lane_tile(V, 1024)
    logits = pl.pallas_call(
        _ln_head_kernel,
        out_shape=jax.ShapeDtypeStruct((R, V), jnp.float32),
        grid=(V // tv,),
        in_specs=[pl.BlockSpec((R, E), lambda j: (0, 0)),
                  pl.BlockSpec((1, E), lambda j: (0, 0)),
                  pl.BlockSpec((tv, E), lambda j: (j, 0))],
        out_specs=pl.BlockSpec((R, tv), lambda j: (0, j)),
        compiler_params=pltpu.CompilerParams(
            dimension_semantics=("parallel",),
            vmem_limit_bytes=_VMEM_LIMIT),
    )(x_pad, ln_w.reshape(1, E), wte)
    return logits[:B]


# -------------------------------- RoPE cache ---------------------------------

def precompute_rope_cache(dim, seq_len, theta=10000.0):
    position = jnp.arange(seq_len, dtype=jnp.float32)
    dim_pos = jnp.arange(0, dim, 2, dtype=jnp.float32)
    freq = 1.0 / theta ** (dim_pos / dim)
    angles = jnp.outer(position, freq)                   # (seq_len, dim//2)
    return jnp.cos(angles), jnp.sin(angles)


# ------------------------------- model forward -------------------------------

def init_params(key, cfg):
    V, E, L = cfg["vocab_size"], cfg["n_embd"], cfg["n_layer"]
    std = 0.02
    std_proj = 0.02 / math.sqrt(2 * L)
    keys = jax.random.split(key, 1 + 6 * L)

    def w(k, shape, s):  # weights stored (in, out) == transposed torch Linear, bf16
        return (jax.random.normal(k, shape, jnp.float32) * s).astype(jnp.bfloat16)

    params = {"wte": w(keys[0], (V, E), std),
              "ln_f": jnp.ones((E,), jnp.float32),
              "blocks": []}
    for l in range(L):
        k = keys[1 + 6 * l: 1 + 6 * (l + 1)]
        params["blocks"].append({
            "ln_1": jnp.ones((E,), jnp.float32),
            "w_attn": w(k[0], (E, 3 * E), std),
            "w_proj": w(k[1], (E, E), std_proj),
            "ln_2": jnp.ones((E,), jnp.float32),
            "w_up": w(k[2], (E, 4 * E), std),
            "w_gate": w(k[3], (E, 4 * E), std),
            "w_down": w(k[4], (4 * E, E), std_proj),
        })
    return params


def gpt_forward(params, idx, cfg):
    B, T = idx.shape
    E, H, L = cfg["n_embd"], cfg["n_head"], cfg["n_layer"]
    D = E // H
    resid_scale = 1.0 / math.sqrt(2 * L)
    attn_scale = 1.0 / math.sqrt(D)

    cos_full, sin_full = precompute_rope_cache(D, max(T, 32))
    cos, sin = cos_full[:T], sin_full[:T]                 # (T, D//2) f32

    # residual stream in f32; matmul operands in bf16
    x2d = params["wte"][idx].astype(jnp.float32).reshape(B * T, E)

    for blk in params["blocks"]:
        # ---- attention branch: fused LN1 + qkv projection ----
        qkv = ln_matmul(x2d, blk["ln_1"], blk["w_attn"])          # (B*T, 3E) bf16
        qkv = qkv.reshape(B, T, 3, H, D)
        # v keeps the original head-dim layout (it passes through to c_proj)
        v = qkv[:, :, 2].transpose(0, 2, 1, 3)                     # (B, H, T, D)
        # q/k: go head-major AND de-interleave the head dim ([evens|odds]) in
        # one relayout; RoPE/clip/scale happen inside the attention kernel and
        # QK^T is invariant under this fixed permutation.
        qk = qkv[:, :, :2].reshape(B, T, 2, H, D // 2, 2)
        qk = qk.transpose(2, 0, 3, 1, 5, 4).reshape(2, B, H, T, D)  # bf16
        y = causal_flash_attention_rope(qk[0], qk[1], v,
                                        cos, sin, attn_scale)       # (B,H,T,D) bf16
        y2d = y.transpose(0, 2, 1, 3).reshape(B * T, E)
        # c_proj matmul with fused scaled residual add
        x2d = matmul_resid(y2d, blk["w_proj"], x2d, resid_scale)    # (B*T, E) f32

        # ---- MLP branch: fused LN2 + up/gate + SiLU, then down + residual ----
        h = ln_swiglu(x2d, blk["ln_2"], blk["w_up"], blk["w_gate"])  # (B*T,4E) bf16
        x2d = matmul_resid(h, blk["w_down"], x2d, resid_scale)

    # inference path: ln_f + tied lm_head on the last position only
    x_last = x2d.reshape(B, T, E)[:, -1, :]                          # (B, E)
    logits = ln_lm_head(x_last, params["ln_f"], params["wte"])       # (B, V) f32
    return logits[:, None, :], None


# ----------------------------------- main ------------------------------------

if __name__ == "__main__":
    cfg = dict(vocab_size=256, block_size=64, n_layer=2, n_head=4, n_embd=32)
    B, T = 2, 8

    key = jax.random.PRNGKey(0)
    pkey, ikey = jax.random.split(key)
    params = init_params(pkey, cfg)
    idx = jax.random.randint(ikey, (B, T), 0, cfg["vocab_size"], dtype=jnp.int32)

    fwd = jax.jit(partial(gpt_forward, cfg=cfg))
    logits, loss = fwd(params, idx)
    logits = jax.block_until_ready(logits)
    assert logits.shape == (B, 1, cfg["vocab_size"])
    assert loss is None
    assert bool(jnp.all(jnp.isfinite(logits)))
    print("KERNEL_OK")
</pallas_src>

<mosaic_0001>
module attributes {stable_mosaic.version = 11 : i64} {
  func.func @_ln_matmul_kernel(%arg0: i32, %arg1: i32, %arg2: memref<16x32xf32, #tpu.memory_space<vmem>>, %arg3: memref<1x32xf32, #tpu.memory_space<vmem>>, %arg4: memref<32x96xbf16, #tpu.memory_space<vmem>>, %arg5: memref<16x96xbf16, #tpu.memory_space<vmem>>) attributes {dimension_semantics = [#tpu.dimension_semantics<parallel>, #tpu.dimension_semantics<parallel>], iteration_bounds = array<i64: 1, 1>, scalar_prefetch = 0 : i64, scratch_operands = 0 : i64, tpu.core_type = #tpu.core_type<tc>, window_params = [{transform_indices = @transform_0, window_bounds = array<i64: 16, 32>}, {pipeline_mode = #tpu.pipeline_mode<synchronous>, transform_indices = @transform_1, window_bounds = array<i64: 1, 32>}, {transform_indices = @transform_2, window_bounds = array<i64: 32, 96>}, {transform_indices = @transform_3, window_bounds = array<i64: 16, 96>}]} {
    %c0 = arith.constant 0 : index
    %c0_0 = arith.constant 0 : index
    %0 = vector.load %arg2[%c0, %c0_0] : memref<16x32xf32, #tpu.memory_space<vmem>>, vector<16x32xf32>
    %cst = arith.constant dense<0.000000e+00> : vector<16xf32>
    %1 = vector.multi_reduction <add>, %0, %cst [1] : vector<16x32xf32> to vector<16xf32>
    %2 = vector.shape_cast %1 : vector<16xf32> to vector<16x1xf32>
    %cst_1 = arith.constant 3.200000e+01 : f32
    %3 = vector.broadcast %cst_1 : f32 to vector<16x1xf32>
    %4 = arith.divf %2, %3 : vector<16x1xf32>
    %5 = vector.broadcast %4 : vector<16x1xf32> to vector<16x32xf32>
    %6 = arith.subf %0, %5 : vector<16x32xf32>
    %7 = arith.mulf %6, %6 : vector<16x32xf32>
    %cst_2 = arith.constant dense<0.000000e+00> : vector<16xf32>
    %8 = vector.multi_reduction <add>, %7, %cst_2 [1] : vector<16x32xf32> to vector<16xf32>
    %9 = vector.shape_cast %8 : vector<16xf32> to vector<16x1xf32>
    %cst_3 = arith.constant 3.200000e+01 : f32
    %10 = vector.broadcast %cst_3 : f32 to vector<16x1xf32>
    %11 = arith.divf %9, %10 : vector<16x1xf32>
    %cst_4 = arith.constant 9.99999974E-6 : f32
    %12 = vector.broadcast %cst_4 : f32 to vector<16x1xf32>
    %13 = arith.addf %11, %12 : vector<16x1xf32>
    %14 = math.rsqrt %13 : vector<16x1xf32>
    %15 = vector.broadcast %14 : vector<16x1xf32> to vector<16x32xf32>
    %16 = arith.mulf %6, %15 : vector<16x32xf32>
    %c0_5 = arith.constant 0 : index
    %c0_6 = arith.constant 0 : index
    %17 = vector.load %arg3[%c0_5, %c0_6] : memref<1x32xf32, #tpu.memory_space<vmem>>, vector<1x32xf32>
    %18 = vector.broadcast %17 : vector<1x32xf32> to vector<16x32xf32>
    %19 = arith.mulf %16, %18 : vector<16x32xf32>
    %20 = arith.truncf %19 : vector<16x32xf32> to vector<16x32xbf16>
    %c0_7 = arith.constant 0 : index
    %c0_8 = arith.constant 0 : index
    %21 = vector.load %arg4[%c0_7, %c0_8] : memref<32x96xbf16, #tpu.memory_space<vmem>>, vector<32x96xbf16>
    %cst_9 = arith.constant dense<0.000000e+00> : vector<16x96xf32>
    %22 = tpu.matmul %20, %21, %cst_9 {dimension_numbers = #tpu.dot_dimension_numbers<[1], [0], [0], [1], [0, 0, 1, 1], [], []>} : vector<16x32xbf16>, vector<32x96xbf16>, vector<16x96xf32> -> vector<16x96xf32>
    %23 = arith.truncf %22 : vector<16x96xf32> to vector<16x96xbf16>
    %c0_10 = arith.constant 0 : index
    %c0_11 = arith.constant 0 : index
    %24 = vector.load %arg5[%c0_10, %c0_11] : memref<16x96xbf16, #tpu.memory_space<vmem>>, vector<16x96xbf16>
    tpu.vector_store %arg5[%c0_10, %c0_11], %23 {strides = array<i32>} : memref<16x96xbf16, #tpu.memory_space<vmem>>, vector<16x96xbf16>,
    return
  }
  func.func @transform_0(%arg0: i32, %arg1: i32) -> (i32, i32) {
    %c0_i32 = arith.constant 0 : i32
    %c0_i32_0 = arith.constant 0 : i32
    return %arg0, %c0_i32 : i32, i32
  }
  func.func @transform_1(%arg0: i32, %arg1: i32) -> (i32, i32) {
    %c0_i32 = arith.constant 0 : i32
    %c0_i32_0 = arith.constant 0 : i32
    %c0_i32_1 = arith.constant 0 : i32
    return %c0_i32, %c0_i32_0 : i32, i32
  }
  func.func @transform_2(%arg0: i32, %arg1: i32) -> (i32, i32) {
    %c0_i32 = arith.constant 0 : i32
    %c0_i32_0 = arith.constant 0 : i32
    return %c0_i32, %arg1 : i32, i32
  }
  func.func @transform_3(%arg0: i32, %arg1: i32) -> (i32, i32) {
    %c0_i32 = arith.constant 0 : i32
    return %arg0, %arg1 : i32, i32
  }
}

module attributes {stable_mosaic.version = 11 : i64} {
  func.func @_matmul_resid_kernel(%arg0: i32, %arg1: i32, %arg2: i32, %arg3: memref<16x32xbf16, #tpu.memory_space<vmem>>, %arg4: memref<32x32xbf16, #tpu.memory_space<vmem>>, %arg5: memref<16x32xf32, #tpu.memory_space<vmem>>, %arg6: memref<16x32xf32, #tpu.memory_space<vmem>>, %arg7: memref<16x32xf32, #tpu.memory_space<vmem>>) attributes {dimension_semantics = [#tpu.dimension_semantics<parallel>, #tpu.dimension_semantics<parallel>, #tpu.dimension_semantics<arbitrary>], iteration_bounds = array<i64: 1, 1, 1>, scalar_prefetch = 0 : i64, scratch_operands = 1 : i64, tpu.core_type = #tpu.core_type<tc>, window_params = [{transform_indices = @transform_0, window_bounds = array<i64: 16, 32>}, {transform_indices = @transform_1, window_bounds = array<i64: 32, 32>}, {transform_indices = @transform_2, window_bounds = array<i64: 16, 32>}, {transform_indices = @transform_3, window_bounds = array<i64: 16, 32>}]} {
    %c0_i32 = arith.constant 0 : i32
    %0 = arith.cmpi eq, %arg2, %c0_i32 : i32
    %1 = arith.extui %0 : i1 to i32
    %c0_i32_0 = arith.constant 0 : i32
    %2 = arith.cmpi ne, %1, %c0_i32_0 : i32
    scf.if %2 {
      %cst_10 = arith.constant 0.000000e+00 : f32
      %12 = vector.broadcast %cst_10 : f32 to vector<16x32xf32>
      %c0_11 = arith.constant 0 : index
      %c0_12 = arith.constant 0 : index
      %13 = vector.load %arg7[%c0_11, %c0_12] : memref<16x32xf32, #tpu.memory_space<vmem>>, vector<16x32xf32>
      tpu.vector_store %arg7[%c0_11, %c0_12], %12 {strides = array<i32>} : memref<16x32xf32, #tpu.memory_space<vmem>>, vector<16x32xf32>,
    } else {
    }
    %c0 = arith.constant 0 : index
    %c0_1 = arith.constant 0 : index
    %3 = vector.load %arg7[%c0, %c0_1] : memref<16x32xf32, #tpu.memory_space<vmem>>, vector<16x32xf32>
    %c0_2 = arith.constant 0 : index
    %c0_3 = arith.constant 0 : index
    %4 = vector.load %arg3[%c0_2, %c0_3] : memref<16x32xbf16, #tpu.memory_space<vmem>>, vector<16x32xbf16>
    %c0_4 = arith.constant 0 : index
    %c0_5 = arith.constant 0 : index
    %5 = vector.load %arg4[%c0_4, %c0_5] : memref<32x32xbf16, #tpu.memory_space<vmem>>, vector<32x32xbf16>
    %cst = arith.constant dense<0.000000e+00> : vector<16x32xf32>
    %6 = tpu.matmul %4, %5, %cst {dimension_numbers = #tpu.dot_dimension_numbers<[1], [0], [0], [1], [0, 0, 1, 1], [], []>} : vector<16x32xbf16>, vector<32x32xbf16>, vector<16x32xf32> -> vector<16x32xf32>
    %7 = arith.addf %3, %6 : vector<16x32xf32>
    %c0_6 = arith.constant 0 : index
    %c0_7 = arith.constant 0 : index
    %8 = vector.load %arg7[%c0_6, %c0_7] : memref<16x32xf32, #tpu.memory_space<vmem>>, vector<16x32xf32>
    tpu.vector_store %arg7[%c0_6, %c0_7], %7 {strides = array<i32>} : memref<16x32xf32, #tpu.memory_space<vmem>>, vector<16x32xf32>,
    %c0_i32_8 = arith.constant 0 : i32
    %9 = arith.cmpi eq, %arg2, %c0_i32_8 : i32
    %10 = arith.extui %9 : i1 to i32
    %c0_i32_9 = arith.constant 0 : i32
    %11 = arith.cmpi ne, %10, %c0_i32_9 : i32
    scf.if %11 {
      %c0_10 = arith.constant 0 : index
      %c0_11 = arith.constant 0 : index
      %12 = vector.load %arg5[%c0_10, %c0_11] : memref<16x32xf32, #tpu.memory_space<vmem>>, vector<16x32xf32>
      %c0_12 = arith.constant 0 : index
      %c0_13 = arith.constant 0 : index
      %13 = vector.load %arg7[%c0_12, %c0_13] : memref<16x32xf32, #tpu.memory_space<vmem>>, vector<16x32xf32>
      %cst_14 = arith.constant 5.000000e-01 : f32
      %14 = vector.broadcast %cst_14 : f32 to vector<16x32xf32>
      %15 = arith.mulf %14, %13 : vector<16x32xf32>
      %16 = arith.addf %12, %15 : vector<16x32xf32>
      %c0_15 = arith.constant 0 : index
      %c0_16 = arith.constant 0 : index
      %17 = vector.load %arg6[%c0_15, %c0_16] : memref<16x32xf32, #tpu.memory_space<vmem>>, vector<16x32xf32>
      tpu.vector_store %arg6[%c0_15, %c0_16], %16 {strides = array<i32>} : memref<16x32xf32, #tpu.memory_space<vmem>>, vector<16x32xf32>,
    } else {
    }
    return
  }
  func.func @transform_0(%arg0: i32, %arg1: i32, %arg2: i32) -> (i32, i32) {
    %c0_i32 = arith.constant 0 : i32
    return %arg0, %arg2 : i32, i32
  }
  func.func @transform_1(%arg0: i32, %arg1: i32, %arg2: i32) -> (i32, i32) {
    %c0_i32 = arith.constant 0 : i32
    return %arg2, %arg1 : i32, i32
  }
  func.func @transform_2(%arg0: i32, %arg1: i32, %arg2: i32) -> (i32, i32) {
    %c0_i32 = arith.constant 0 : i32
    return %arg0, %arg1 : i32, i32
  }
  func.func @transform_3(%arg0: i32, %arg1: i32, %arg2: i32) -> (i32, i32) {
    %c0_i32 = arith.constant 0 : i32
    return %arg0, %arg1 : i32, i32
  }
}

module attributes {stable_mosaic.version = 11 : i64} {
  func.func @_flash_rope_attn_kernel(%arg0: i32, %arg1: i32, %arg2: i32, %arg3: i32, %arg4: memref<1x1x8x8xbf16, #tpu.memory_space<vmem>>, %arg5: memref<1x1x8x8xbf16, #tpu.memory_space<vmem>>, %arg6: memref<1x1x8x8xbf16, #tpu.memory_space<vmem>>, %arg7: memref<8x4xf32, #tpu.memory_space<vmem>>, %arg8: memref<8x4xf32, #tpu.memory_space<vmem>>, %arg9: memref<8x4xf32, #tpu.memory_space<vmem>>, %arg10: memref<8x4xf32, #tpu.memory_space<vmem>>, %arg11: memref<1x1x8x8xbf16, #tpu.memory_space<vmem>>, %arg12: memref<8x8xf32, #tpu.memory_space<vmem>>, %arg13: memref<8x1xf32, #tpu.memory_space<vmem>>, %arg14: memref<8x1xf32, #tpu.memory_space<vmem>>, %arg15: memref<8x8xf32, #tpu.memory_space<vmem>>) attributes {dimension_semantics = [#tpu.dimension_semantics<parallel>, #tpu.dimension_semantics<parallel>, #tpu.dimension_semantics<parallel>, #tpu.dimension_semantics<arbitrary>], iteration_bounds = array<i64: 2, 4, 1, 1>, scalar_prefetch = 0 : i64, scratch_operands = 4 : i64, tpu.core_type = #tpu.core_type<tc>, window_params = [{transform_indices = @transform_0, window_bounds = array<i64: 1, 1, 8, 8>}, {transform_indices = @transform_1, window_bounds = array<i64: 1, 1, 8, 8>}, {transform_indices = @transform_2, window_bounds = array<i64: 1, 1, 8, 8>}, {transform_indices = @transform_3, window_bounds = array<i64: 8, 4>}, {transform_indices = @transform_4, window_bounds = array<i64: 8, 4>}, {transform_indices = @transform_5, window_bounds = array<i64: 8, 4>}, {transform_indices = @transform_6, window_bounds = array<i64: 8, 4>}, {transform_indices = @transform_7, window_bounds = array<i64: 1, 1, 8, 8>}]} {
    %c8_i32 = arith.constant 8 : i32
    %0 = arith.muli %arg2, %c8_i32 : i32
    %c8_i32_0 = arith.constant 8 : i32
    %1 = arith.muli %arg3, %c8_i32_0 : i32
    %c0_i32 = arith.constant 0 : i32
    %2 = arith.cmpi eq, %arg3, %c0_i32 : i32
    %3 = arith.extui %2 : i1 to i32
    %c0_i32_1 = arith.constant 0 : i32
    %4 = arith.cmpi ne, %3, %c0_i32_1 : i32
    scf.if %4 {
      %cst = arith.constant -1.000000e+30 : f32
      %12 = vector.broadcast %cst : f32 to vector<8x1xf32>
      %c0 = arith.constant 0 : index
      %c0_5 = arith.constant 0 : index
      %13 = vector.load %arg13[%c0, %c0_5] : memref<8x1xf32, #tpu.memory_space<vmem>>, vector<8x1xf32>
      tpu.vector_store %arg13[%c0, %c0_5], %12 {strides = array<i32>} : memref<8x1xf32, #tpu.memory_space<vmem>>, vector<8x1xf32>,
      %cst_6 = arith.constant 0.000000e+00 : f32
      %14 = vector.broadcast %cst_6 : f32 to vector<8x1xf32>
      %c0_7 = arith.constant 0 : index
      %c0_8 = arith.constant 0 : index
      %15 = vector.load %arg14[%c0_7, %c0_8] : memref<8x1xf32, #tpu.memory_space<vmem>>, vector<8x1xf32>
      tpu.vector_store %arg14[%c0_7, %c0_8], %14 {strides = array<i32>} : memref<8x1xf32, #tpu.memory_space<vmem>>, vector<8x1xf32>,
      %cst_9 = arith.constant 0.000000e+00 : f32
      %16 = vector.broadcast %cst_9 : f32 to vector<8x8xf32>
      %c0_10 = arith.constant 0 : index
      %c0_11 = arith.constant 0 : index
      %17 = vector.load %arg15[%c0_10, %c0_11] : memref<8x8xf32, #tpu.memory_space<vmem>>, vector<8x8xf32>
      tpu.vector_store %arg15[%c0_10, %c0_11], %16 {strides = array<i32>} : memref<8x8xf32, #tpu.memory_space<vmem>>, vector<8x8xf32>,
      %c0_12 = arith.constant 0 : index
      %c0_13 = arith.constant 0 : index
      %c0_14 = arith.constant 0 : index
      %c0_15 = arith.constant 0 : index
      %18 = vector.load %arg4[%c0_12, %c0_13, %c0_14, %c0_15] : memref<1x1x8x8xbf16, #tpu.memory_space<vmem>>, vector<1x1x8x8xbf16>
      %19 = vector.shape_cast %18 : vector<1x1x8x8xbf16> to vector<8x8xbf16>
      %20 = arith.extf %19 : vector<8x8xbf16> to vector<8x8xf32>
      %c0_16 = arith.constant 0 : index
      %c0_17 = arith.constant 0 : index
      %21 = vector.load %arg7[%c0_16, %c0_17] : memref<8x4xf32, #tpu.memory_space<vmem>>, vector<8x4xf32>
      %c0_18 = arith.constant 0 : index
      %c0_19 = arith.constant 0 : index
      %22 = vector.load %arg8[%c0_18, %c0_19] : memref<8x4xf32, #tpu.memory_space<vmem>>, vector<8x4xf32>
      %23 = vector.extract_strided_slice %20 {offsets = [0, 0], sizes = [8, 4], strides = [1, 1]} : vector<8x8xf32> to vector<8x4xf32>
      %24 = vector.extract_strided_slice %20 {offsets = [0, 4], sizes = [8, 4], strides = [1, 1]} : vector<8x8xf32> to vector<8x4xf32>
      %25 = arith.mulf %23, %21 : vector<8x4xf32>
      %26 = arith.mulf %24, %22 : vector<8x4xf32>
      %27 = arith.subf %25, %26 : vector<8x4xf32>
      %28 = arith.mulf %24, %21 : vector<8x4xf32>
      %29 = arith.mulf %27, %22 : vector<8x4xf32>
      %30 = arith.addf %28, %29 : vector<8x4xf32>
      %cst_20 = arith.constant -1.000000e+02 : f32
      %cst_21 = arith.constant 1.000000e+02 : f32
      %31 = vector.broadcast %cst_20 : f32 to vector<8x4xf32>
      %32 = arith.maximumf %31, %27 : vector<8x4xf32>
      %33 = vector.broadcast %cst_21 : f32 to vector<8x4xf32>
      %34 = arith.minimumf %33, %32 : vector<8x4xf32>
      %cst_22 = arith.constant 0.353553385 : f32
      %35 = vector.broadcast %cst_22 : f32 to vector<8x4xf32>
      %36 = arith.mulf %34, %35 : vector<8x4xf32>
      %c0_23 = arith.constant 0 : index
      %c0_24 = arith.constant 0 : index
      %37 = vector.load %arg12[%c0_23, %c0_24] : memref<8x8xf32, #tpu.memory_space<vmem>>, vector<8x4xf32>
      tpu.vector_store %arg12[%c0_23, %c0_24], %36 {strides = array<i32>} : memref<8x8xf32, #tpu.memory_space<vmem>>, vector<8x4xf32>,
      %cst_25 = arith.constant -1.000000e+02 : f32
      %cst_26 = arith.constant 1.000000e+02 : f32
      %38 = vector.broadcast %cst_25 : f32 to vector<8x4xf32>
      %39 = arith.maximumf %38, %30 : vector<8x4xf32>
      %40 = vector.broadcast %cst_26 : f32 to vector<8x4xf32>
      %41 = arith.minimumf %40, %39 : vector<8x4xf32>
      %cst_27 = arith.constant 0.353553385 : f32
      %42 = vector.broadcast %cst_27 : f32 to vector<8x4xf32>
      %43 = arith.mulf %41, %42 : vector<8x4xf32>
      %c0_28 = arith.constant 0 : index
      %c4 = arith.constant 4 : index
      %44 = vector.load %arg12[%c0_28, %c4] : memref<8x8xf32, #tpu.memory_space<vmem>>, vector<8x4xf32>
      tpu.vector_store %arg12[%c0_28, %c4], %43 {strides = array<i32>} : memref<8x8xf32, #tpu.memory_space<vmem>>, vector<8x4xf32>,
    } else {
    }
    %c7_i32 = arith.constant 7 : i32
    %5 = arith.addi %0, %c7_i32 : i32
    %6 = arith.cmpi sle, %1, %5 : i32
    %7 = arith.extui %6 : i1 to i32
    %c0_i32_2 = arith.constant 0 : i32
    %8 = arith.cmpi ne, %7, %c0_i32_2 : i32
    scf.if %8 {
      %c0 = arith.constant 0 : index
      %c0_5 = arith.constant 0 : index
      %c0_6 = arith.constant 0 : index
      %c0_7 = arith.constant 0 : index
      %12 = vector.load %arg5[%c0, %c0_5, %c0_6, %c0_7] : memref<1x1x8x8xbf16, #tpu.memory_space<vmem>>, vector<1x1x8x8xbf16>
      %13 = vector.shape_cast %12 : vector<1x1x8x8xbf16> to vector<8x8xbf16>
      %14 = arith.extf %13 : vector<8x8xbf16> to vector<8x8xf32>
      %c0_8 = arith.constant 0 : index
      %c0_9 = arith.constant 0 : index
      %15 = vector.load %arg9[%c0_8, %c0_9] : memref<8x4xf32, #tpu.memory_space<vmem>>, vector<8x4xf32>
      %c0_10 = arith.constant 0 : index
      %c0_11 = arith.constant 0 : index
      %16 = vector.load %arg10[%c0_10, %c0_11] : memref<8x4xf32, #tpu.memory_space<vmem>>, vector<8x4xf32>
      %17 = vector.extract_strided_slice %14 {offsets = [0, 0], sizes = [8, 4], strides = [1, 1]} : vector<8x8xf32> to vector<8x4xf32>
      %18 = vector.extract_strided_slice %14 {offsets = [0, 4], sizes = [8, 4], strides = [1, 1]} : vector<8x8xf32> to vector<8x4xf32>
      %19 = arith.mulf %17, %15 : vector<8x4xf32>
      %20 = arith.mulf %18, %16 : vector<8x4xf32>
      %21 = arith.subf %19, %20 : vector<8x4xf32>
      %22 = arith.mulf %18, %15 : vector<8x4xf32>
      %23 = arith.mulf %21, %16 : vector<8x4xf32>
      %24 = arith.addf %22, %23 : vector<8x4xf32>
      %cst = arith.constant -1.000000e+02 : f32
      %cst_12 = arith.constant 1.000000e+02 : f32
      %25 = vector.broadcast %cst : f32 to vector<8x4xf32>
      %26 = arith.maximumf %25, %21 : vector<8x4xf32>
      %27 = vector.broadcast %cst_12 : f32 to vector<8x4xf32>
      %28 = arith.minimumf %27, %26 : vector<8x4xf32>
      %29 = arith.truncf %28 : vector<8x4xf32> to vector<8x4xbf16>
      %cst_13 = arith.constant -1.000000e+02 : f32
      %cst_14 = arith.constant 1.000000e+02 : f32
      %30 = vector.broadcast %cst_13 : f32 to vector<8x4xf32>
      %31 = arith.maximumf %30, %24 : vector<8x4xf32>
      %32 = vector.broadcast %cst_14 : f32 to vector<8x4xf32>
      %33 = arith.minimumf %32, %31 : vector<8x4xf32>
      %34 = arith.truncf %33 : vector<8x4xf32> to vector<8x4xbf16>
      %c0_15 = arith.constant 0 : index
      %c0_16 = arith.constant 0 : index
      %c0_17 = arith.constant 0 : index
      %c0_18 = arith.constant 0 : index
      %35 = vector.load %arg6[%c0_15, %c0_16, %c0_17, %c0_18] : memref<1x1x8x8xbf16, #tpu.memory_space<vmem>>, vector<1x1x8x8xbf16>
      %36 = vector.shape_cast %35 : vector<1x1x8x8xbf16> to vector<8x8xbf16>
      %37 = arith.extf %36 : vector<8x8xbf16> to vector<8x8xf32>
      %cst_19 = arith.constant -1.000000e+02 : f32
      %cst_20 = arith.constant 1.000000e+02 : f32
      %38 = vector.broadcast %cst_19 : f32 to vector<8x8xf32>
      %39 = arith.maximumf %38, %37 : vector<8x8xf32>
      %40 = vector.broadcast %cst_20 : f32 to vector<8x8xf32>
      %41 = arith.minimumf %40, %39 : vector<8x8xf32>
      %42 = arith.truncf %41 : vector<8x8xf32> to vector<8x8xbf16>
      %c0_21 = arith.constant 0 : index
      %c0_22 = arith.constant 0 : index
      %43 = vector.load %arg12[%c0_21, %c0_22] : memref<8x8xf32, #tpu.memory_space<vmem>>, vector<8x4xf32>
      %44 = arith.truncf %43 : vector<8x4xf32> to vector<8x4xbf16>
      %c0_23 = arith.constant 0 : index
      %c4 = arith.constant 4 : index
      %45 = vector.load %arg12[%c0_23, %c4] : memref<8x8xf32, #tpu.memory_space<vmem>>, vector<8x4xf32>
      %46 = arith.truncf %45 : vector<8x4xf32> to vector<8x4xbf16>
      %cst_24 = arith.constant dense<0.000000e+00> : vector<8x8xf32>
      %47 = tpu.matmul %44, %29, %cst_24 {dimension_numbers = #tpu.dot_dimension_numbers<[1], [1], [0], [0], [0, 0, 1, 0], [], []>} : vector<8x4xbf16>, vector<8x4xbf16>, vector<8x8xf32> -> vector<8x8xf32>
      %cst_25 = arith.constant dense<0.000000e+00> : vector<8x8xf32>
      %48 = tpu.matmul %46, %34, %cst_25 {dimension_numbers = #tpu.dot_dimension_numbers<[1], [1], [0], [0], [0, 0, 1, 0], [], []>} : vector<8x4xbf16>, vector<8x4xbf16>, vector<8x8xf32> -> vector<8x8xf32>
      %49 = arith.addf %47, %48 : vector<8x8xf32>
      %50 = tpu.iota {dimensions = array<i32: 0>} : vector<8x8xi32>
      %51 = vector.broadcast %0 : i32 to vector<8x8xi32>
      %52 = arith.addi %51, %50 : vector<8x8xi32>
      %53 = tpu.iota {dimensions = array<i32: 1>} : vector<8x8xi32>
      %54 = vector.broadcast %1 : i32 to vector<8x8xi32>
      %55 = arith.addi %54, %53 : vector<8x8xi32>
      %56 = arith.cmpi sle, %55, %52 : vector<8x8xi32>
      %cst_26 = arith.constant -1.000000e+30 : f32
      %57 = vector.broadcast %cst_26 : f32 to vector<8x8xf32>
      %58 = arith.select %56, %49, %57 : vector<8x8xi1>, vector<8x8xf32>
      %c0_27 = arith.constant 0 : index
      %c0_28 = arith.constant 0 : index
      %59 = vector.load %arg13[%c0_27, %c0_28] : memref<8x1xf32, #tpu.memory_space<vmem>>, vector<8x1xf32>
      %cst_29 = arith.constant dense<0xFF800000> : vector<8xf32>
      %60 = vector.multi_reduction <maximumf>, %58, %cst_29 [1] : vector<8x8xf32> to vector<8xf32>
      %61 = vector.shape_cast %60 : vector<8xf32> to vector<8x1xf32>
      %62 = arith.maximumf %59, %61 : vector<8x1xf32>
      %63 = arith.subf %59, %62 : vector<8x1xf32>
      %64 = math.exp %63 : vector<8x1xf32>
      %65 = vector.broadcast %62 : vector<8x1xf32> to vector<8x8xf32>
      %66 = arith.subf %58, %65 : vector<8x8xf32>
      %67 = math.exp %66 : vector<8x8xf32>
      %c0_30 = arith.constant 0 : index
      %c0_31 = arith.constant 0 : index
      %68 = vector.load %arg14[%c0_30, %c0_31] : memref<8x1xf32, #tpu.memory_space<vmem>>, vector<8x1xf32>
      %69 = arith.mulf %64, %68 : vector<8x1xf32>
      %cst_32 = arith.constant dense<0.000000e+00> : vector<8xf32>
      %70 = vector.multi_reduction <add>, %67, %cst_32 [1] : vector<8x8xf32> to vector<8xf32>
      %71 = vector.shape_cast %70 : vector<8xf32> to vector<8x1xf32>
      %72 = arith.addf %69, %71 : vector<8x1xf32>
      %c0_33 = arith.constant 0 : index
      %c0_34 = arith.constant 0 : index
      %73 = vector.load %arg14[%c0_33, %c0_34] : memref<8x1xf32, #tpu.memory_space<vmem>>, vector<8x1xf32>
      tpu.vector_store %arg14[%c0_33, %c0_34], %72 {strides = array<i32>} : memref<8x1xf32, #tpu.memory_space<vmem>>, vector<8x1xf32>,
      %c0_35 = arith.constant 0 : index
      %c0_36 = arith.constant 0 : index
      %74 = vector.load %arg15[%c0_35, %c0_36] : memref<8x8xf32, #tpu.memory_space<vmem>>, vector<8x8xf32>
      %75 = vector.broadcast %64 : vector<8x1xf32> to vector<8x8xf32>
      %76 = arith.mulf %75, %74 : vector<8x8xf32>
      %77 = arith.truncf %67 : vector<8x8xf32> to vector<8x8xbf16>
      %cst_37 = arith.constant dense<0.000000e+00> : vector<8x8xf32>
      %78 = tpu.matmul %77, %42, %cst_37 {dimension_numbers = #tpu.dot_dimension_numbers<[1], [0], [0], [1], [0, 0, 1, 1], [], []>} : vector<8x8xbf16>, vector<8x8xbf16>, vector<8x8xf32> -> vector<8x8xf32>
      %79 = arith.addf %76, %78 : vector<8x8xf32>
      %c0_38 = arith.constant 0 : index
      %c0_39 = arith.constant 0 : index
      %80 = vector.load %arg15[%c0_38, %c0_39] : memref<8x8xf32, #tpu.memory_space<vmem>>, vector<8x8xf32>
      tpu.vector_store %arg15[%c0_38, %c0_39], %79 {strides = array<i32>} : memref<8x8xf32, #tpu.memory_space<vmem>>, vector<8x8xf32>,
      %c0_40 = arith.constant 0 : index
      %c0_41 = arith.constant 0 : index
      %81 = vector.load %arg13[%c0_40, %c0_41] : memref<8x1xf32, #tpu.memory_space<vmem>>, vector<8x1xf32>
      tpu.vector_store %arg13[%c0_40, %c0_41], %62 {strides = array<i32>} : memref<8x1xf32, #tpu.memory_space<vmem>>, vector<8x1xf32>,
    } else {
    }
    %c0_i32_3 = arith.constant 0 : i32
    %9 = arith.cmpi eq, %arg3, %c0_i32_3 : i32
    %10 = arith.extui %9 : i1 to i32
    %c0_i32_4 = arith.constant 0 : i32
    %11 = arith.cmpi ne, %10, %c0_i32_4 : i32
    scf.if %11 {
      %c0 = arith.constant 0 : index
      %c0_5 = arith.constant 0 : index
      %12 = vector.load %arg14[%c0, %c0_5] : memref<8x1xf32, #tpu.memory_space<vmem>>, vector<8x1xf32>
      %13 = tpu.reciprocal %12 {approx = true} : vector<8x1xf32> -> vector<8x1xf32>
      %c0_6 = arith.constant 0 : index
      %c0_7 = arith.constant 0 : index
      %14 = vector.load %arg15[%c0_6, %c0_7] : memref<8x8xf32, #tpu.memory_space<vmem>>, vector<8x8xf32>
      %15 = vector.broadcast %13 : vector<8x1xf32> to vector<8x8xf32>
      %16 = arith.mulf %14, %15 : vector<8x8xf32>
      %17 = arith.truncf %16 : vector<8x8xf32> to vector<8x8xbf16>
      %c0_8 = arith.constant 0 : index
      %c0_9 = arith.constant 0 : index
      %c0_10 = arith.constant 0 : index
      %c0_11 = arith.constant 0 : index
      %18 = vector.load %arg11[%c0_8, %c0_9, %c0_10, %c0_11] : memref<1x1x8x8xbf16, #tpu.memory_space<vmem>>, vector<1x1x8x8xbf16>
      %19 = vector.shape_cast %18 : vector<1x1x8x8xbf16> to vector<8x8xbf16>
      %20 = vector.shape_cast %17 : vector<8x8xbf16> to vector<1x1x8x8xbf16>
      tpu.vector_store %arg11[%c0_8, %c0_9, %c0_10, %c0_11], %20 {strides = array<i32>} : memref<1x1x8x8xbf16, #tpu.memory_space<vmem>>, vector<1x1x8x8xbf16>,
    } else {
    }
    return
  }
  func.func @transform_0(%arg0: i32, %arg1: i32, %arg2: i32, %arg3: i32) -> (i32, i32, i32, i32) {
    %c0_i32 = arith.constant 0 : i32
    %c0_i32_0 = arith.constant 0 : i32
    return %arg0, %arg1, %arg2, %c0_i32 : i32, i32, i32, i32
  }
  func.func @transform_1(%arg0: i32, %arg1: i32, %arg2: i32, %arg3: i32) -> (i32, i32, i32, i32) {
    %c0_i32 = arith.constant 0 : i32
    %c0_i32_0 = arith.constant 0 : i32
    return %arg0, %arg1, %arg3, %c0_i32 : i32, i32, i32, i32
  }
  func.func @transform_2(%arg0: i32, %arg1: i32, %arg2: i32, %arg3: i32) -> (i32, i32, i32, i32) {
    %c0_i32 = arith.constant 0 : i32
    %c0_i32_0 = arith.constant 0 : i32
    return %arg0, %arg1, %arg3, %c0_i32 : i32, i32, i32, i32
  }
  func.func @transform_3(%arg0: i32, %arg1: i32, %arg2: i32, %arg3: i32) -> (i32, i32) {
    %c0_i32 = arith.constant 0 : i32
    %c0_i32_0 = arith.constant 0 : i32
    return %arg2, %c0_i32 : i32, i32
  }
  func.func @transform_4(%arg0: i32, %arg1: i32, %arg2: i32, %arg3: i32) -> (i32, i32) {
    %c0_i32 = arith.constant 0 : i32
    %c0_i32_0 = arith.constant 0 : i32
    return %arg2, %c0_i32 : i32, i32
  }
  func.func @transform_5(%arg0: i32, %arg1: i32, %arg2: i32, %arg3: i32) -> (i32, i32) {
    %c0_i32 = arith.constant 0 : i32
    %c0_i32_0 = arith.constant 0 : i32
    return %arg3, %c0_i32 : i32, i32
  }
  func.func @transform_6(%arg0: i32, %arg1: i32, %arg2: i32, %arg3: i32) -> (i32, i32) {
    %c0_i32 = arith.constant 0 : i32
    %c0_i32_0 = arith.constant 0 : i32
    return %arg3, %c0_i32 : i32, i32
  }
  func.func @transform_7(%arg0: i32, %arg1: i32, %arg2: i32, %arg3: i32) -> (i32, i32, i32, i32) {
    %c0_i32 = arith.constant 0 : i32
    %c0_i32_0 = arith.constant 0 : i32
    return %arg0, %arg1, %arg2, %c0_i32 : i32, i32, i32, i32
  }
}

module attributes {stable_mosaic.version = 11 : i64} {
  func.func @_ln_swiglu_kernel(%arg0: i32, %arg1: i32, %arg2: memref<16x32xf32, #tpu.memory_space<vmem>>, %arg3: memref<1x32xf32, #tpu.memory_space<vmem>>, %arg4: memref<32x128xbf16, #tpu.memory_space<vmem>>, %arg5: memref<32x128xbf16, #tpu.memory_space<vmem>>, %arg6: memref<16x128xbf16, #tpu.memory_space<vmem>>) attributes {dimension_semantics = [#tpu.dimension_semantics<parallel>, #tpu.dimension_semantics<parallel>], iteration_bounds = array<i64: 1, 1>, scalar_prefetch = 0 : i64, scratch_operands = 0 : i64, tpu.core_type = #tpu.core_type<tc>, window_params = [{transform_indices = @transform_0, window_bounds = array<i64: 16, 32>}, {pipeline_mode = #tpu.pipeline_mode<synchronous>, transform_indices = @transform_1, window_bounds = array<i64: 1, 32>}, {transform_indices = @transform_2, window_bounds = array<i64: 32, 128>}, {transform_indices = @transform_3, window_bounds = array<i64: 32, 128>}, {transform_indices = @transform_4, window_bounds = array<i64: 16, 128>}]} {
    %c0 = arith.constant 0 : index
    %c0_0 = arith.constant 0 : index
    %0 = vector.load %arg2[%c0, %c0_0] : memref<16x32xf32, #tpu.memory_space<vmem>>, vector<16x32xf32>
    %cst = arith.constant dense<0.000000e+00> : vector<16xf32>
    %1 = vector.multi_reduction <add>, %0, %cst [1] : vector<16x32xf32> to vector<16xf32>
    %2 = vector.shape_cast %1 : vector<16xf32> to vector<16x1xf32>
    %cst_1 = arith.constant 3.200000e+01 : f32
    %3 = vector.broadcast %cst_1 : f32 to vector<16x1xf32>
    %4 = arith.divf %2, %3 : vector<16x1xf32>
    %5 = vector.broadcast %4 : vector<16x1xf32> to vector<16x32xf32>
    %6 = arith.subf %0, %5 : vector<16x32xf32>
    %7 = arith.mulf %6, %6 : vector<16x32xf32>
    %cst_2 = arith.constant dense<0.000000e+00> : vector<16xf32>
    %8 = vector.multi_reduction <add>, %7, %cst_2 [1] : vector<16x32xf32> to vector<16xf32>
    %9 = vector.shape_cast %8 : vector<16xf32> to vector<16x1xf32>
    %cst_3 = arith.constant 3.200000e+01 : f32
    %10 = vector.broadcast %cst_3 : f32 to vector<16x1xf32>
    %11 = arith.divf %9, %10 : vector<16x1xf32>
    %cst_4 = arith.constant 9.99999974E-6 : f32
    %12 = vector.broadcast %cst_4 : f32 to vector<16x1xf32>
    %13 = arith.addf %11, %12 : vector<16x1xf32>
    %14 = math.rsqrt %13 : vector<16x1xf32>
    %15 = vector.broadcast %14 : vector<16x1xf32> to vector<16x32xf32>
    %16 = arith.mulf %6, %15 : vector<16x32xf32>
    %c0_5 = arith.constant 0 : index
    %c0_6 = arith.constant 0 : index
    %17 = vector.load %arg3[%c0_5, %c0_6] : memref<1x32xf32, #tpu.memory_space<vmem>>, vector<1x32xf32>
    %18 = vector.broadcast %17 : vector<1x32xf32> to vector<16x32xf32>
    %19 = arith.mulf %16, %18 : vector<16x32xf32>
    %20 = arith.truncf %19 : vector<16x32xf32> to vector<16x32xbf16>
    %c0_7 = arith.constant 0 : index
    %c0_8 = arith.constant 0 : index
    %21 = vector.load %arg4[%c0_7, %c0_8] : memref<32x128xbf16, #tpu.memory_space<vmem>>, vector<32x128xbf16>
    %cst_9 = arith.constant dense<0.000000e+00> : vector<16x128xf32>
    %22 = tpu.matmul %20, %21, %cst_9 {dimension_numbers = #tpu.dot_dimension_numbers<[1], [0], [0], [1], [0, 0, 1, 1], [], []>} : vector<16x32xbf16>, vector<32x128xbf16>, vector<16x128xf32> -> vector<16x128xf32>
    %c0_10 = arith.constant 0 : index
    %c0_11 = arith.constant 0 : index
    %23 = vector.load %arg5[%c0_10, %c0_11] : memref<32x128xbf16, #tpu.memory_space<vmem>>, vector<32x128xbf16>
    %cst_12 = arith.constant dense<0.000000e+00> : vector<16x128xf32>
    %24 = tpu.matmul %20, %23, %cst_12 {dimension_numbers = #tpu.dot_dimension_numbers<[1], [0], [0], [1], [0, 0, 1, 1], [], []>} : vector<16x32xbf16>, vector<32x128xbf16>, vector<16x128xf32> -> vector<16x128xf32>
    %25 = arith.negf %24 : vector<16x128xf32>
    %26 = math.exp %25 : vector<16x128xf32>
    %cst_13 = arith.constant 1.000000e+00 : f32
    %27 = vector.broadcast %cst_13 : f32 to vector<16x128xf32>
    %28 = arith.addf %27, %26 : vector<16x128xf32>
    %29 = arith.divf %27, %28 : vector<16x128xf32>
    %30 = arith.mulf %24, %29 : vector<16x128xf32>
    %31 = arith.mulf %22, %30 : vector<16x128xf32>
    %32 = arith.truncf %31 : vector<16x128xf32> to vector<16x128xbf16>
    %c0_14 = arith.constant 0 : index
    %c0_15 = arith.constant 0 : index
    %33 = vector.load %arg6[%c0_14, %c0_15] : memref<16x128xbf16, #tpu.memory_space<vmem>>, vector<16x128xbf16>
    tpu.vector_store %arg6[%c0_14, %c0_15], %32 {strides = array<i32>} : memref<16x128xbf16, #tpu.memory_space<vmem>>, vector<16x128xbf16>,
    return
  }
  func.func @transform_0(%arg0: i32, %arg1: i32) -> (i32, i32) {
    %c0_i32 = arith.constant 0 : i32
    %c0_i32_0 = arith.constant 0 : i32
    return %arg0, %c0_i32 : i32, i32
  }
  func.func @transform_1(%arg0: i32, %arg1: i32) -> (i32, i32) {
    %c0_i32 = arith.constant 0 : i32
    %c0_i32_0 = arith.constant 0 : i32
    %c0_i32_1 = arith.constant 0 : i32
    return %c0_i32, %c0_i32_0 : i32, i32
  }
  func.func @transform_2(%arg0: i32, %arg1: i32) -> (i32, i32) {
    %c0_i32 = arith.constant 0 : i32
    %c0_i32_0 = arith.constant 0 : i32
    return %c0_i32, %arg1 : i32, i32
  }
  func.func @transform_3(%arg0: i32, %arg1: i32) -> (i32, i32) {
    %c0_i32 = arith.constant 0 : i32
    %c0_i32_0 = arith.constant 0 : i32
    return %c0_i32, %arg1 : i32, i32
  }
  func.func @transform_4(%arg0: i32, %arg1: i32) -> (i32, i32) {
    %c0_i32 = arith.constant 0 : i32
    return %arg0, %arg1 : i32, i32
  }
}

module attributes {stable_mosaic.version = 11 : i64} {
  func.func @_matmul_resid_kernel(%arg0: i32, %arg1: i32, %arg2: i32, %arg3: memref<16x128xbf16, #tpu.memory_space<vmem>>, %arg4: memref<128x32xbf16, #tpu.memory_space<vmem>>, %arg5: memref<16x32xf32, #tpu.memory_space<vmem>>, %arg6: memref<16x32xf32, #tpu.memory_space<vmem>>, %arg7: memref<16x32xf32, #tpu.memory_space<vmem>>) attributes {dimension_semantics = [#tpu.dimension_semantics<parallel>, #tpu.dimension_semantics<parallel>, #tpu.dimension_semantics<arbitrary>], iteration_bounds = array<i64: 1, 1, 1>, scalar_prefetch = 0 : i64, scratch_operands = 1 : i64, tpu.core_type = #tpu.core_type<tc>, window_params = [{transform_indices = @transform_0, window_bounds = array<i64: 16, 128>}, {transform_indices = @transform_1, window_bounds = array<i64: 128, 32>}, {transform_indices = @transform_2, window_bounds = array<i64: 16, 32>}, {transform_indices = @transform_3, window_bounds = array<i64: 16, 32>}]} {
    %c0_i32 = arith.constant 0 : i32
    %0 = arith.cmpi eq, %arg2, %c0_i32 : i32
    %1 = arith.extui %0 : i1 to i32
    %c0_i32_0 = arith.constant 0 : i32
    %2 = arith.cmpi ne, %1, %c0_i32_0 : i32
    scf.if %2 {
      %cst_10 = arith.constant 0.000000e+00 : f32
      %12 = vector.broadcast %cst_10 : f32 to vector<16x32xf32>
      %c0_11 = arith.constant 0 : index
      %c0_12 = arith.constant 0 : index
      %13 = vector.load %arg7[%c0_11, %c0_12] : memref<16x32xf32, #tpu.memory_space<vmem>>, vector<16x32xf32>
      tpu.vector_store %arg7[%c0_11, %c0_12], %12 {strides = array<i32>} : memref<16x32xf32, #tpu.memory_space<vmem>>, vector<16x32xf32>,
    } else {
    }
    %c0 = arith.constant 0 : index
    %c0_1 = arith.constant 0 : index
    %3 = vector.load %arg7[%c0, %c0_1] : memref<16x32xf32, #tpu.memory_space<vmem>>, vector<16x32xf32>
    %c0_2 = arith.constant 0 : index
    %c0_3 = arith.constant 0 : index
    %4 = vector.load %arg3[%c0_2, %c0_3] : memref<16x128xbf16, #tpu.memory_space<vmem>>, vector<16x128xbf16>
    %c0_4 = arith.constant 0 : index
    %c0_5 = arith.constant 0 : index
    %5 = vector.load %arg4[%c0_4, %c0_5] : memref<128x32xbf16, #tpu.memory_space<vmem>>, vector<128x32xbf16>
    %cst = arith.constant dense<0.000000e+00> : vector<16x32xf32>
    %6 = tpu.matmul %4, %5, %cst {dimension_numbers = #tpu.dot_dimension_numbers<[1], [0], [0], [1], [0, 0, 1, 1], [], []>} : vector<16x128xbf16>, vector<128x32xbf16>, vector<16x32xf32> -> vector<16x32xf32>
    %7 = arith.addf %3, %6 : vector<16x32xf32>
    %c0_6 = arith.constant 0 : index
    %c0_7 = arith.constant 0 : index
    %8 = vector.load %arg7[%c0_6, %c0_7] : memref<16x32xf32, #tpu.memory_space<vmem>>, vector<16x32xf32>
    tpu.vector_store %arg7[%c0_6, %c0_7], %7 {strides = array<i32>} : memref<16x32xf32, #tpu.memory_space<vmem>>, vector<16x32xf32>,
    %c0_i32_8 = arith.constant 0 : i32
    %9 = arith.cmpi eq, %arg2, %c0_i32_8 : i32
    %10 = arith.extui %9 : i1 to i32
    %c0_i32_9 = arith.constant 0 : i32
    %11 = arith.cmpi ne, %10, %c0_i32_9 : i32
    scf.if %11 {
      %c0_10 = arith.constant 0 : index
      %c0_11 = arith.constant 0 : index
      %12 = vector.load %arg5[%c0_10, %c0_11] : memref<16x32xf32, #tpu.memory_space<vmem>>, vector<16x32xf32>
      %c0_12 = arith.constant 0 : index
      %c0_13 = arith.constant 0 : index
      %13 = vector.load %arg7[%c0_12, %c0_13] : memref<16x32xf32, #tpu.memory_space<vmem>>, vector<16x32xf32>
      %cst_14 = arith.constant 5.000000e-01 : f32
      %14 = vector.broadcast %cst_14 : f32 to vector<16x32xf32>
      %15 = arith.mulf %14, %13 : vector<16x32xf32>
      %16 = arith.addf %12, %15 : vector<16x32xf32>
      %c0_15 = arith.constant 0 : index
      %c0_16 = arith.constant 0 : index
      %17 = vector.load %arg6[%c0_15, %c0_16] : memref<16x32xf32, #tpu.memory_space<vmem>>, vector<16x32xf32>
      tpu.vector_store %arg6[%c0_15, %c0_16], %16 {strides = array<i32>} : memref<16x32xf32, #tpu.memory_space<vmem>>, vector<16x32xf32>,
    } else {
    }
    return
  }
  func.func @transform_0(%arg0: i32, %arg1: i32, %arg2: i32) -> (i32, i32) {
    %c0_i32 = arith.constant 0 : i32
    return %arg0, %arg2 : i32, i32
  }
  func.func @transform_1(%arg0: i32, %arg1: i32, %arg2: i32) -> (i32, i32) {
    %c0_i32 = arith.constant 0 : i32
    return %arg2, %arg1 : i32, i32
  }
  func.func @transform_2(%arg0: i32, %arg1: i32, %arg2: i32) -> (i32, i32) {
    %c0_i32 = arith.constant 0 : i32
    return %arg0, %arg1 : i32, i32
  }
  func.func @transform_3(%arg0: i32, %arg1: i32, %arg2: i32) -> (i32, i32) {
    %c0_i32 = arith.constant 0 : i32
    return %arg0, %arg1 : i32, i32
  }
}

module attributes {stable_mosaic.version = 11 : i64} {
  func.func @_ln_head_kernel(%arg0: i32, %arg1: memref<8x32xf32, #tpu.memory_space<vmem>>, %arg2: memref<1x32xf32, #tpu.memory_space<vmem>>, %arg3: memref<256x32xbf16, #tpu.memory_space<vmem>>, %arg4: memref<8x256xf32, #tpu.memory_space<vmem>>) attributes {dimension_semantics = [#tpu.dimension_semantics<parallel>], iteration_bounds = array<i64: 1>, scalar_prefetch = 0 : i64, scratch_operands = 0 : i64, tpu.core_type = #tpu.core_type<tc>, window_params = [{pipeline_mode = #tpu.pipeline_mode<synchronous>, transform_indices = @transform_0, window_bounds = array<i64: 8, 32>}, {pipeline_mode = #tpu.pipeline_mode<synchronous>, transform_indices = @transform_1, window_bounds = array<i64: 1, 32>}, {transform_indices = @transform_2, window_bounds = array<i64: 256, 32>}, {transform_indices = @transform_3, window_bounds = array<i64: 8, 256>}]} {
    %c0 = arith.constant 0 : index
    %c0_0 = arith.constant 0 : index
    %0 = vector.load %arg1[%c0, %c0_0] : memref<8x32xf32, #tpu.memory_space<vmem>>, vector<8x32xf32>
    %cst = arith.constant dense<0.000000e+00> : vector<8xf32>
    %1 = vector.multi_reduction <add>, %0, %cst [1] : vector<8x32xf32> to vector<8xf32>
    %2 = vector.shape_cast %1 : vector<8xf32> to vector<8x1xf32>
    %cst_1 = arith.constant 3.200000e+01 : f32
    %3 = vector.broadcast %cst_1 : f32 to vector<8x1xf32>
    %4 = arith.divf %2, %3 : vector<8x1xf32>
    %5 = vector.broadcast %4 : vector<8x1xf32> to vector<8x32xf32>
    %6 = arith.subf %0, %5 : vector<8x32xf32>
    %7 = arith.mulf %6, %6 : vector<8x32xf32>
    %cst_2 = arith.constant dense<0.000000e+00> : vector<8xf32>
    %8 = vector.multi_reduction <add>, %7, %cst_2 [1] : vector<8x32xf32> to vector<8xf32>
    %9 = vector.shape_cast %8 : vector<8xf32> to vector<8x1xf32>
    %cst_3 = arith.constant 3.200000e+01 : f32
    %10 = vector.broadcast %cst_3 : f32 to vector<8x1xf32>
    %11 = arith.divf %9, %10 : vector<8x1xf32>
    %cst_4 = arith.constant 9.99999974E-6 : f32
    %12 = vector.broadcast %cst_4 : f32 to vector<8x1xf32>
    %13 = arith.addf %11, %12 : vector<8x1xf32>
    %14 = math.rsqrt %13 : vector<8x1xf32>
    %15 = vector.broadcast %14 : vector<8x1xf32> to vector<8x32xf32>
    %16 = arith.mulf %6, %15 : vector<8x32xf32>
    %c0_5 = arith.constant 0 : index
    %c0_6 = arith.constant 0 : index
    %17 = vector.load %arg2[%c0_5, %c0_6] : memref<1x32xf32, #tpu.memory_space<vmem>>, vector<1x32xf32>
    %18 = vector.broadcast %17 : vector<1x32xf32> to vector<8x32xf32>
    %19 = arith.mulf %16, %18 : vector<8x32xf32>
    %20 = arith.truncf %19 : vector<8x32xf32> to vector<8x32xbf16>
    %c0_7 = arith.constant 0 : index
    %c0_8 = arith.constant 0 : index
    %21 = vector.load %arg3[%c0_7, %c0_8] : memref<256x32xbf16, #tpu.memory_space<vmem>>, vector<256x32xbf16>
    %cst_9 = arith.constant dense<0.000000e+00> : vector<8x256xf32>
    %22 = tpu.matmul %20, %21, %cst_9 {dimension_numbers = #tpu.dot_dimension_numbers<[1], [1], [0], [0], [0, 0, 1, 0], [], []>} : vector<8x32xbf16>, vector<256x32xbf16>, vector<8x256xf32> -> vector<8x256xf32>
    %c0_10 = arith.constant 0 : index
    %c0_11 = arith.constant 0 : index
    %23 = vector.load %arg4[%c0_10, %c0_11] : memref<8x256xf32, #tpu.memory_space<vmem>>, vector<8x256xf32>
    tpu.vector_store %arg4[%c0_10, %c0_11], %22 {strides = array<i32>} : memref<8x256xf32, #tpu.memory_space<vmem>>, vector<8x256xf32>,
    return
  }
  func.func @transform_0(%arg0: i32) -> (i32, i32) {
    %c0_i32 = arith.constant 0 : i32
    %c0_i32_0 = arith.constant 0 : i32
    %c0_i32_1 = arith.constant 0 : i32
    return %c0_i32, %c0_i32_0 : i32, i32
  }
  func.func @transform_1(%arg0: i32) -> (i32, i32) {
    %c0_i32 = arith.constant 0 : i32
    %c0_i32_0 = arith.constant 0 : i32
    %c0_i32_1 = arith.constant 0 : i32
    return %c0_i32, %c0_i32_0 : i32, i32
  }
  func.func @transform_2(%arg0: i32) -> (i32, i32) {
    %c0_i32 = arith.constant 0 : i32
    %c0_i32_0 = arith.constant 0 : i32
    return %arg0, %c0_i32 : i32, i32
  }
  func.func @transform_3(%arg0: i32) -> (i32, i32) {
    %c0_i32 = arith.constant 0 : i32
    %c0_i32_0 = arith.constant 0 : i32
    return %c0_i32, %arg0 : i32, i32
  }
}

</mosaic_0001>

<llo_original>
// kernel: gpt_forward.11
$region0: #{gpt_forward.11}
  #allocation0 [shape = 'u32[]', space=smem, size = 0x4, offset = 0x4, fixed_abs, tag = 'smem constant byte address 0x4 - core index']
  #allocation1 [shape = 'u32[144,128]{1,0:T(1,128)}', space=vmem, size = 0x12000, scoped, tag = 'internal scratch']
  %s0 = inlined_call_operand.vmem [shape: f32[16,32], index: 0, kind: input, shape index: {}]
  %s1 = inlined_call_operand.vmem [shape: f32[1,32], index: 1, kind: input, shape index: {}]
  %s2 = inlined_call_operand.vmem [shape: bf16[32,96], index: 2, kind: input, shape index: {}]
  %s3 = inlined_call_operand.vmem [shape: bf16[16,96], index: 3, kind: output, shape index: {}]
  %s4 = sld [smem:[#allocation0]]
  $region22: #{gpt_forward.11} parent=0
    _
  %s6 = ssub.s32 1, %s4
  %s7 = scalar_select 0, %s6, %s4
  // Predicated region
  $region2: #{gpt_forward.11} parent=0 // pred_check
    _
  $region3: #{gpt_forward.11} parent=0 // pred_check_branch
    %9 = sbr.rel (0) target = $region5
  $region4: #{gpt_forward.11} parent=0 // pred_region
    _
  $region5: #{gpt_forward.11} parent=0 // pred_fallthru
    _
  // Predicated region
  $region6: #{gpt_forward.11} parent=0 // pred_check
    _
  $region7: #{gpt_forward.11} parent=0 // pred_check_branch
    %11 = sbr.rel (0) target = $region9
  $region8: #{gpt_forward.11} parent=0 // pred_region
    _
  $region9: #{gpt_forward.11} parent=0 // pred_fallthru
    _
  // Predicated region
  $region10: #{gpt_forward.11} parent=0 // pred_check
    _
  $region11: #{gpt_forward.11} parent=0 // pred_check_branch
    %13 = sbr.rel (0) target = $region13
  $region12: #{gpt_forward.11} parent=0 // pred_region
    _
  $region13: #{gpt_forward.11} parent=0 // pred_fallthru
    _
  %v15 = vld [vmem:[%s0] sm:$0xff]
  %v16 = vld [vmem:[%s0 + $0x8] sm:$0xff]
  %vm17 = vcmask 261120
  %v18 = vsel %vm17, %v15, 0.0
  %19 = vadd.xlane.f32.xlu0 %v18
  %v20 = vpop.xlane.xlu0 %19
  %v21 = vsel %vm17, %v16, 0.0
  %22 = vadd.xlane.f32.xlu0 %v21
  %v23 = vpop.xlane.xlu0 %22
  %v24 = vrcp.pop 32.0
  %v25 = vmul.f32 %v20, %v24
  %v26 = vmul.f32 %v23, %v24
  %v27 = vsub.f32 %v15, %v25
  %v28 = vsub.f32 %v16, %v26
  %v29 = vmul.f32 %v27, %v27
  %v30 = vmul.f32 %v28, %v28
  %v31 = vsel %vm17, %v29, 0.0
  %32 = vadd.xlane.f32.xlu0 %v31
  %v33 = vpop.xlane.xlu0 %32
  %v34 = vsel %vm17, %v30, 0.0
  %35 = vadd.xlane.f32.xlu0 %v34
  %v36 = vpop.xlane.xlu0 %35
  %v37 = vmul.f32 %v33, %v24
  %v38 = vmul.f32 %v36, %v24
  %v39 = vadd.f32 %v37, 1e-05
  %v40 = vadd.f32 %v38, 1e-05
  %v41 = vrsqrt.pop %v39
  %v42 = vrsqrt.pop %v40
  %v43 = vmul.f32 %v27, %v41
  %v44 = vmul.f32 %v28, %v42
  %v45 = vld [vmem:[%s1] sm:$0x1]
  %v47 = vlaneseq
  %v48 = vshrl.u32 %v47, 7
  %v49 = vsub.s32 0, %v48
  %v50 = vrot.slane %v45, %v49
  %v52 = vmul.f32 %v43, %v50
  %v53 = vmul.f32 %v44, %v50
  %v54 = vpack.c.bf16 %v53, %v52
  %v55 = vld [vmem:[%s2] sm:$0xf]
  %v56 = vld [vmem:[%s2 + $0x4] sm:$0xf]
  %v57 = vld [vmem:[%s2 + $0x8] sm:$0xf]
  %v58 = vld [vmem:[%s2 + $0xc] sm:$0xf]
  %v63 = vunpack.c.l.b16 %v55
  %v64 = vunpack.c.l.b16 %v56
  %v65 = vunpack.c.l.b16 %v57
  %v66 = vunpack.c.l.b16 %v58
  %v67 = vpack.c.b16 %v64, %v63
  %v68 = vpack.c.b16 %v66, %v65
  %v72 = vsel %vm17, %v54, 0
  %74 = vmatprep.subr.bf16.mxu0 0
  %75 = vmatpush1.bf16.msra.mxu0 %v67
  %76 = vmatprep.subr.bf16.mxu0 0
  %77 = vmatpush1.bf16.msra.mxu0 %v68
  %78 = vmatprep.subr.bf16.mxu0 0
  %79 = vmatpush1.bf16.msra.mxu0 0
  %80 = vmatprep.subr.bf16.mxu0 0
  %81 = vmatpush1.bf16.msra.mxu0 0
  %82 = vmatprep.subr.bf16.mxu0 0
  %83 = vmatpush1.bf16.msra.mxu0 0
  %84 = vmatprep.subr.bf16.mxu0 0
  %85 = vmatpush1.bf16.msra.mxu0 0
  %86 = vmatprep.subr.bf16.mxu0 0
  %87 = vmatpush1.bf16.msra.mxu0 0
  %88 = vmatprep.subr.bf16.mxu0 0
  %89 = vmatpush1.bf16.msra.mxu0 0
  %90 = vmatprep.subr.bf16.mxu0 0
  %91 = vmatpush1.bf16.msra.mxu0 0
  %92 = vmatprep.subr.bf16.mxu0 0
  %93 = vmatpush1.bf16.msra.mxu0 0
  %94 = vmatprep.subr.bf16.mxu0 0
  %95 = vmatpush1.bf16.msra.mxu0 0
  %96 = vmatprep.subr.bf16.mxu0 0
  %97 = vmatpush1.bf16.msra.mxu0 0
  %98 = vmatprep.subr.bf16.mxu0 0
  %99 = vmatpush1.bf16.msra.mxu0 0
  %100 = vmatprep.subr.bf16.mxu0 0
  %101 = vmatpush1.bf16.msra.mxu0 0
  %102 = vmatprep.subr.bf16.mxu0 0
  %103 = vmatpush1.bf16.msra.mxu0 0
  %104 = vmatprep.subr.bf16.mxu0 0
  %105 = vmatpush1.bf16.msra.mxu0 0
  %106 = vmatprep.mubr.bf16.mxu0 0
  %107 = vmatmul.mubr.bf16.gmra.mrb[0].mxu0 %v72
  %v108 = vpop.f32.mrb[0].mxu0
  %v109 = vadd.f32 0.0, %v108
  %v110 = vpop.f32.mrb[0].mxu0
  %v111 = vpop.f32.mrb[0].mxu0
  %v112 = vadd.f32 0.0, %v111
  %v113 = vpop.f32.mrb[0].mxu0
  %114 = vdwg.mxu0
  %v115 = vpack.c.bf16 %v112, %v109
  %v117 = vunpack.c.l.b16 %v115
  %v118 = vunpack.c.h.b16 %v115
  %v119 = vpack.c.b16 %v117, %v117
  %v120 = vpack.c.b16 %v118, %v118
  %vm123 = vcmask 781312
  %124 = vst.msk [vmem:[%s3] sm:$0xf] %vm123, %v119
  %125 = vst.msk [vmem:[%s3 + $0x4] sm:$0xf] %vm123, %v120
  // Predicated region
  $region14: #{gpt_forward.11} parent=0 // pred_check
    _
  $region15: #{gpt_forward.11} parent=0 // pred_check_branch
    %127 = sbr.rel (0) target = $region17
  $region16: #{gpt_forward.11} parent=0 // pred_region
    _
  $region17: #{gpt_forward.11} parent=0 // pred_fallthru
    _
  // Predicated region
  $region18: #{gpt_forward.11} parent=0 // pred_check
    _
  $region19: #{gpt_forward.11} parent=0 // pred_check_branch
    %129 = sbr.rel (0) target = $region21
  $region20: #{gpt_forward.11} parent=0 // pred_region
    _
  $region21: #{gpt_forward.11} parent=0 // pred_fallthru
    _

// kernel: gpt_forward.13
$region0: #{gpt_forward.13}
  #allocation0 [shape = 'u32[]', space=smem, size = 0x4, offset = 0x4, fixed_abs, tag = 'smem constant byte address 0x4 - core index']
  #allocation1 [shape = 'u32[144,128]{1,0:T(1,128)}', space=vmem, size = 0x12000, scoped, tag = 'internal scratch']
  #allocation2 [shape = 'f32[16,32]{1,0:T(8,128)}', space=vmem, size = 0x2000, scoped, tag = 'scratch operand']
  %s0 = inlined_call_operand.vmem [shape: bf16[16,32], index: 0, kind: input, shape index: {}]
  %s1 = inlined_call_operand.vmem [shape: bf16[32,32], index: 1, kind: input, shape index: {}]
  %s2 = inlined_call_operand.vmem [shape: f32[16,32], index: 2, kind: input, shape index: {}]
  %s3 = inlined_call_operand.vmem [shape: f32[16,32], index: 3, kind: output, shape index: {}]
  %s4 = sld [smem:[#allocation0]]
  $region30: #{gpt_forward.13} parent=0
    _
  %s6 = ssub.s32 1, %s4
  %s7 = scalar_select 0, %s6, %s4
  // Predicated region
  $region2: #{gpt_forward.13} parent=0 // pred_check
    _
  $region3: #{gpt_forward.13} parent=0 // pred_check_branch
    %9 = sbr.rel (0) target = $region5
  $region4: #{gpt_forward.13} parent=0 // pred_region
    _
  $region5: #{gpt_forward.13} parent=0 // pred_fallthru
    _
  // Predicated region
  $region6: #{gpt_forward.13} parent=0 // pred_check
    _
  $region7: #{gpt_forward.13} parent=0 // pred_check_branch
    %11 = sbr.rel (0) target = $region9
  $region8: #{gpt_forward.13} parent=0 // pred_region
    _
  $region9: #{gpt_forward.13} parent=0 // pred_fallthru
    _
  // Predicated region
  $region10: #{gpt_forward.13} parent=0 // pred_check
    _
  $region11: #{gpt_forward.13} parent=0 // pred_check_branch
    %13 = sbr.rel (0) target = $region13
  $region12: #{gpt_forward.13} parent=0 // pred_region
    _
  $region13: #{gpt_forward.13} parent=0 // pred_fallthru
    _
  %p15 = scmp.eq.s32.totalorder 0, 0
  // Predicated region
  $region14: #{gpt_forward.13} parent=0 // pred_check
    %p16 = pneg %p15
  $region15: #{gpt_forward.13} parent=0 // pred_check_branch
    %18 = sbr.rel (%p16) target = $region17
  $region16: #{gpt_forward.13} parent=0 // pred_region
    %vm19 = vcmask 261120
    %20 = vst.msk [vmem:[#allocation2] sm:$0xff] %vm19, 0.0
    %21 = vst.msk [vmem:[#allocation2 + $0x8] sm:$0xff] %vm19, 0.0
  $region17: #{gpt_forward.13} parent=0 // pred_fallthru
    _
  %v22 = vld [vmem:[#allocation2] sm:$0xff]
  %v23 = vld [vmem:[#allocation2 + $0x8] sm:$0xff]
  %v24 = vld [vmem:[%s0] sm:$0xf]
  %v25 = vld [vmem:[%s0 + $0x4] sm:$0xf]
  %v26 = vld [vmem:[%s1] sm:$0xf]
  %v27 = vld [vmem:[%s1 + $0x4] sm:$0xf]
  %v28 = vld [vmem:[%s1 + $0x8] sm:$0xf]
  %v29 = vld [vmem:[%s1 + $0xc] sm:$0xf]
  %v32 = vunpack.c.l.b16 %v24
  %v33 = vunpack.c.l.b16 %v25
  %v34 = vpack.c.b16 %v33, %v32
  %v39 = vunpack.c.l.b16 %v26
  %v40 = vunpack.c.l.b16 %v27
  %v41 = vunpack.c.l.b16 %v28
  %v42 = vunpack.c.l.b16 %v29
  %v43 = vpack.c.b16 %v40, %v39
  %v44 = vpack.c.b16 %v42, %v41
  %vm47 = vcmask 261120
  %v49 = vsel %vm47, %v34, 0
  %51 = vmatprep.subr.bf16.mxu0 0
  %52 = vmatpush1.bf16.msra.mxu0 %v43
  %53 = vmatprep.subr.bf16.mxu0 0
  %54 = vmatpush1.bf16.msra.mxu0 %v44
  %55 = vmatprep.subr.bf16.mxu0 0
  %56 = vmatpush1.bf16.msra.mxu0 0
  %57 = vmatprep.subr.bf16.mxu0 0
  %58 = vmatpush1.bf16.msra.mxu0 0
  %59 = vmatprep.subr.bf16.mxu0 0
  %60 = vmatpush1.bf16.msra.mxu0 0
  %61 = vmatprep.subr.bf16.mxu0 0
  %62 = vmatpush1.bf16.msra.mxu0 0
  %63 = vmatprep.subr.bf16.mxu0 0
  %64 = vmatpush1.bf16.msra.mxu0 0
  %65 = vmatprep.subr.bf16.mxu0 0
  %66 = vmatpush1.bf16.msra.mxu0 0
  %67 = vmatprep.subr.bf16.mxu0 0
  %68 = vmatpush1.bf16.msra.mxu0 0
  %69 = vmatprep.subr.bf16.mxu0 0
  %70 = vmatpush1.bf16.msra.mxu0 0
  %71 = vmatprep.subr.bf16.mxu0 0
  %72 = vmatpush1.bf16.msra.mxu0 0
  %73 = vmatprep.subr.bf16.mxu0 0
  %74 = vmatpush1.bf16.msra.mxu0 0
  %75 = vmatprep.subr.bf16.mxu0 0
  %76 = vmatpush1.bf16.msra.mxu0 0
  %77 = vmatprep.subr.bf16.mxu0 0
  %78 = vmatpush1.bf16.msra.mxu0 0
  %79 = vmatprep.subr.bf16.mxu0 0
  %80 = vmatpush1.bf16.msra.mxu0 0
  %81 = vmatprep.subr.bf16.mxu0 0
  %82 = vmatpush1.bf16.msra.mxu0 0
  %83 = vmatprep.mubr.bf16.mxu0 0
  %84 = vmatmul.mubr.bf16.gmra.mrb[0].mxu0 %v49
  %v85 = vpop.f32.mrb[0].mxu0
  %v86 = vadd.f32 0.0, %v85
  %v87 = vpop.f32.mrb[0].mxu0
  %v88 = vpop.f32.mrb[0].mxu0
  %v89 = vadd.f32 0.0, %v88
  %v90 = vpop.f32.mrb[0].mxu0
  %91 = vdwg.mxu0
  %v92 = vadd.f32 %v22, %v86
  %v93 = vadd.f32 %v23, %v89
  %94 = vst.msk [vmem:[#allocation2] sm:$0xff] %vm47, %v92
  %95 = vst.msk [vmem:[#allocation2 + $0x8] sm:$0xff] %vm47, %v93
  // Predicated region
  $region18: #{gpt_forward.13} parent=0 // pred_check
    %p96 = pneg %p15
  $region19: #{gpt_forward.13} parent=0 // pred_check_branch
    %98 = sbr.rel (%p96) target = $region21
  $region20: #{gpt_forward.13} parent=0 // pred_region
    %v99 = vld [vmem:[%s2] sm:$0xff]
    %v100 = vld [vmem:[%s2 + $0x8] sm:$0xff]
    %v101 = vld [vmem:[#allocation2] sm:$0xff]
    %v102 = vld [vmem:[#allocation2 + $0x8] sm:$0xff]
    %v103 = vmul.f32 %v101, 0.5
    %v104 = vmul.f32 %v102, 0.5
    %v105 = vadd.f32 %v99, %v103
    %v106 = vadd.f32 %v100, %v104
    %107 = vst.msk [vmem:[%s3] sm:$0xff] %vm47, %v105
    %108 = vst.msk [vmem:[%s3 + $0x8] sm:$0xff] %vm47, %v106
  $region21: #{gpt_forward.13} parent=0 // pred_fallthru
    _
  // Predicated region
  $region22: #{gpt_forward.13} parent=0 // pred_check
    _
  $region23: #{gpt_forward.13} parent=0 // pred_check_branch
    %110 = sbr.rel (0) target = $region25
  $region24: #{gpt_forward.13} parent=0 // pred_region
    _
  $region25: #{gpt_forward.13} parent=0 // pred_fallthru
    _
  // Predicated region
  $region26: #{gpt_forward.13} parent=0 // pred_check
    _
  $region27: #{gpt_forward.13} parent=0 // pred_check_branch
    %112 = sbr.rel (0) target = $region29
  $region28: #{gpt_forward.13} parent=0 // pred_region
    _
  $region29: #{gpt_forward.13} parent=0 // pred_fallthru
    _

// kernel: gpt_forward.14
$region0: #{gpt_forward.14}
  #allocation0 [shape = 'u32[]', space=smem, size = 0x4, offset = 0x4, fixed_abs, tag = 'smem constant byte address 0x4 - core index']
  #allocation1 [shape = 'u32[144,128]{1,0:T(1,128)}', space=vmem, size = 0x12000, scoped, tag = 'internal scratch']
  %s0 = inlined_call_operand.vmem [shape: f32[16,32], index: 0, kind: input, shape index: {}]
  %s1 = inlined_call_operand.vmem [shape: f32[1,32], index: 1, kind: input, shape index: {}]
  %s2 = inlined_call_operand.vmem [shape: bf16[32,128], index: 2, kind: input, shape index: {}]
  %s3 = inlined_call_operand.vmem [shape: bf16[32,128], index: 3, kind: input, shape index: {}]
  %s4 = inlined_call_operand.vmem [shape: bf16[16,128], index: 4, kind: output, shape index: {}]
  %s5 = sld [smem:[#allocation0]]
  $region26: #{gpt_forward.14} parent=0
    _
  %s7 = ssub.s32 1, %s5
  %s8 = scalar_select 0, %s7, %s5
  // Predicated region
  $region2: #{gpt_forward.14} parent=0 // pred_check
    _
  $region3: #{gpt_forward.14} parent=0 // pred_check_branch
    %10 = sbr.rel (0) target = $region5
  $region4: #{gpt_forward.14} parent=0 // pred_region
    _
  $region5: #{gpt_forward.14} parent=0 // pred_fallthru
    _
  // Predicated region
  $region6: #{gpt_forward.14} parent=0 // pred_check
    _
  $region7: #{gpt_forward.14} parent=0 // pred_check_branch
    %12 = sbr.rel (0) target = $region9
  $region8: #{gpt_forward.14} parent=0 // pred_region
    _
  $region9: #{gpt_forward.14} parent=0 // pred_fallthru
    _
  // Predicated region
  $region10: #{gpt_forward.14} parent=0 // pred_check
    _
  $region11: #{gpt_forward.14} parent=0 // pred_check_branch
    %14 = sbr.rel (0) target = $region13
  $region12: #{gpt_forward.14} parent=0 // pred_region
    _
  $region13: #{gpt_forward.14} parent=0 // pred_fallthru
    _
  // Predicated region
  $region14: #{gpt_forward.14} parent=0 // pred_check
    _
  $region15: #{gpt_forward.14} parent=0 // pred_check_branch
    %16 = sbr.rel (0) target = $region17
  $region16: #{gpt_forward.14} parent=0 // pred_region
    _
  $region17: #{gpt_forward.14} parent=0 // pred_fallthru
    _
  %v18 = vld [vmem:[%s0] sm:$0xff]
  %v19 = vld [vmem:[%s0 + $0x8] sm:$0xff]
  %vm20 = vcmask 261120
  %v21 = vsel %vm20, %v18, 0.0
  %22 = vadd.xlane.f32.xlu0 %v21
  %v23 = vpop.xlane.xlu0 %22
  %v24 = vsel %vm20, %v19, 0.0
  %25 = vadd.xlane.f32.xlu0 %v24
  %v26 = vpop.xlane.xlu0 %25
  %v27 = vrcp.pop 32.0
  %v28 = vmul.f32 %v23, %v27
  %v29 = vmul.f32 %v26, %v27
  %v30 = vsub.f32 %v18, %v28
  %v31 = vsub.f32 %v19, %v29
  %v32 = vmul.f32 %v30, %v30
  %v33 = vmul.f32 %v31, %v31
  %v34 = vsel %vm20, %v32, 0.0
  %35 = vadd.xlane.f32.xlu0 %v34
  %v36 = vpop.xlane.xlu0 %35
  %v37 = vsel %vm20, %v33, 0.0
  %38 = vadd.xlane.f32.xlu0 %v37
  %v39 = vpop.xlane.xlu0 %38
  %v40 = vmul.f32 %v36, %v27
  %v41 = vmul.f32 %v39, %v27
  %v42 = vadd.f32 %v40, 1e-05
  %v43 = vadd.f32 %v41, 1e-05
  %v44 = vrsqrt.pop %v42
  %v45 = vrsqrt.pop %v43
  %v46 = vmul.f32 %v30, %v44
  %v47 = vmul.f32 %v31, %v45
  %v48 = vld [vmem:[%s1] sm:$0x1]
  %v50 = vlaneseq
  %v51 = vshrl.u32 %v50, 7
  %v52 = vsub.s32 0, %v51
  %v53 = vrot.slane %v48, %v52
  %v55 = vmul.f32 %v46, %v53
  %v56 = vmul.f32 %v47, %v53
  %v57 = vpack.c.bf16 %v56, %v55
  %v58 = vld [vmem:[%s2] sm:$0xf]
  %v59 = vld [vmem:[%s2 + $0x4] sm:$0xf]
  %v60 = vld [vmem:[%s2 + $0x8] sm:$0xf]
  %v61 = vld [vmem:[%s2 + $0xc] sm:$0xf]
  %v66 = vunpack.c.l.b16 %v58
  %v67 = vunpack.c.l.b16 %v59
  %v68 = vunpack.c.l.b16 %v60
  %v69 = vunpack.c.l.b16 %v61
  %v70 = vpack.c.b16 %v67, %v66
  %v71 = vpack.c.b16 %v69, %v68
  %v75 = vsel %vm20, %v57, 0
  %77 = vmatprep.subr.bf16.mxu0 0
  %78 = vmatpush1.bf16.msra.mxu0 %v70
  %79 = vmatprep.subr.bf16.mxu0 0
  %80 = vmatpush1.bf16.msra.mxu0 %v71
  %81 = vmatprep.subr.bf16.mxu0 0
  %82 = vmatpush1.bf16.msra.mxu0 0
  %83 = vmatprep.subr.bf16.mxu0 0
  %84 = vmatpush1.bf16.msra.mxu0 0
  %85 = vmatprep.subr.bf16.mxu0 0
  %86 = vmatpush1.bf16.msra.mxu0 0
  %87 = vmatprep.subr.bf16.mxu0 0
  %88 = vmatpush1.bf16.msra.mxu0 0
  %89 = vmatprep.subr.bf16.mxu0 0
  %90 = vmatpush1.bf16.msra.mxu0 0
  %91 = vmatprep.subr.bf16.mxu0 0
  %92 = vmatpush1.bf16.msra.mxu0 0
  %93 = vmatprep.subr.bf16.mxu0 0
  %94 = vmatpush1.bf16.msra.mxu0 0
  %95 = vmatprep.subr.bf16.mxu0 0
  %96 = vmatpush1.bf16.msra.mxu0 0
  %97 = vmatprep.subr.bf16.mxu0 0
  %98 = vmatpush1.bf16.msra.mxu0 0
  %99 = vmatprep.subr.bf16.mxu0 0
  %100 = vmatpush1.bf16.msra.mxu0 0
  %101 = vmatprep.subr.bf16.mxu0 0
  %102 = vmatpush1.bf16.msra.mxu0 0
  %103 = vmatprep.subr.bf16.mxu0 0
  %104 = vmatpush1.bf16.msra.mxu0 0
  %105 = vmatprep.subr.bf16.mxu0 0
  %106 = vmatpush1.bf16.msra.mxu0 0
  %107 = vmatprep.subr.bf16.mxu0 0
  %108 = vmatpush1.bf16.msra.mxu0 0
  %109 = vmatprep.mubr.bf16.mxu0 0
  %110 = vmatmul.mubr.bf16.gmra.mrb[0].mxu0 %v75
  %v111 = vpop.f32.mrb[0].mxu0
  %v112 = vadd.f32 0.0, %v111
  %v113 = vpop.f32.mrb[0].mxu0
  %v114 = vpop.f32.mrb[0].mxu0
  %v115 = vadd.f32 0.0, %v114
  %v116 = vpop.f32.mrb[0].mxu0
  %117 = vdwg.mxu0
  %v118 = vld [vmem:[%s3] sm:$0xf]
  %v119 = vld [vmem:[%s3 + $0x4] sm:$0xf]
  %v120 = vld [vmem:[%s3 + $0x8] sm:$0xf]
  %v121 = vld [vmem:[%s3 + $0xc] sm:$0xf]
  %v126 = vunpack.c.l.b16 %v118
  %v127 = vunpack.c.l.b16 %v119
  %v128 = vunpack.c.l.b16 %v120
  %v129 = vunpack.c.l.b16 %v121
  %v130 = vpack.c.b16 %v127, %v126
  %v131 = vpack.c.b16 %v129, %v128
  %134 = vmatprep.subr.bf16.mxu0 0
  %135 = vmatpush1.bf16.msra.mxu0 %v130
  %136 = vmatprep.subr.bf16.mxu0 0
  %137 = vmatpush1.bf16.msra.mxu0 %v131
  %138 = vmatprep.subr.bf16.mxu0 0
  %139 = vmatpush1.bf16.msra.mxu0 0
  %140 = vmatprep.subr.bf16.mxu0 0
  %141 = vmatpush1.bf16.msra.mxu0 0
  %142 = vmatprep.subr.bf16.mxu0 0
  %143 = vmatpush1.bf16.msra.mxu0 0
  %144 = vmatprep.subr.bf16.mxu0 0
  %145 = vmatpush1.bf16.msra.mxu0 0
  %146 = vmatprep.subr.bf16.mxu0 0
  %147 = vmatpush1.bf16.msra.mxu0 0
  %148 = vmatprep.subr.bf16.mxu0 0
  %149 = vmatpush1.bf16.msra.mxu0 0
  %150 = vmatprep.subr.bf16.mxu0 0
  %151 = vmatpush1.bf16.msra.mxu0 0
  %152 = vmatprep.subr.bf16.mxu0 0
  %153 = vmatpush1.bf16.msra.mxu0 0
  %154 = vmatprep.subr.bf16.mxu0 0
  %155 = vmatpush1.bf16.msra.mxu0 0
  %156 = vmatprep.subr.bf16.mxu0 0
  %157 = vmatpush1.bf16.msra.mxu0 0
  %158 = vmatprep.subr.bf16.mxu0 0
  %159 = vmatpush1.bf16.msra.mxu0 0
  %160 = vmatprep.subr.bf16.mxu0 0
  %161 = vmatpush1.bf16.msra.mxu0 0
  %162 = vmatprep.subr.bf16.mxu0 0
  %163 = vmatpush1.bf16.msra.mxu0 0
  %164 = vmatprep.subr.bf16.mxu0 0
  %165 = vmatpush1.bf16.msra.mxu0 0
  %166 = vmatprep.mubr.bf16.mxu0 0
  %167 = vmatmul.mubr.bf16.gmra.mrb[0].mxu0 %v75
  %v168 = vpop.f32.mrb[0].mxu0
  %v169 = vadd.f32 0.0, %v168
  %v170 = vpop.f32.mrb[0].mxu0
  %v171 = vpop.f32.mrb[0].mxu0
  %v172 = vadd.f32 0.0, %v171
  %v173 = vpop.f32.mrb[0].mxu0
  %174 = vdwg.mxu0
  %v175 = vxor.u32 %v169, 2147483648
  %v176 = vxor.u32 %v172, 2147483648
  %v177 = vmul.f32 %v175, 1.442695
  %v178 = vpow.pop %v177
  %v179 = vmul.f32 %v176, 1.442695
  %v180 = vpow.pop %v179
  %v181 = vadd.f32 %v178, 1.0
  %v182 = vadd.f32 %v180, 1.0
  %v183 = vrcp.pop %v181
  %v184 = vmul.f32 1.0, %v183
  %v185 = vrcp.pop %v182
  %v186 = vmul.f32 1.0, %v185
  %v187 = vmul.f32 %v169, %v184
  %v188 = vmul.f32 %v172, %v186
  %v189 = vmul.f32 %v112, %v187
  %v190 = vmul.f32 %v115, %v188
  %v191 = vpack.c.bf16 %v190, %v189
  %v193 = vunpack.c.l.b16 %v191
  %v194 = vunpack.c.h.b16 %v191
  %v195 = vpack.c.b16 %v193, %v193
  %v196 = vpack.c.b16 %v194, %v194
  %199 = vst [vmem:[%s4] sm:$0xf] %v195
  %200 = vst [vmem:[%s4 + $0x4] sm:$0xf] %v196
  // Predicated region
  $region18: #{gpt_forward.14} parent=0 // pred_check
    _
  $region19: #{gpt_forward.14} parent=0 // pred_check_branch
    %202 = sbr.rel (0) target = $region21
  $region20: #{gpt_forward.14} parent=0 // pred_region
    _
  $region21: #{gpt_forward.14} parent=0 // pred_fallthru
    _
  // Predicated region
  $region22: #{gpt_forward.14} parent=0 // pred_check
    _
  $region23: #{gpt_forward.14} parent=0 // pred_check_branch
    %204 = sbr.rel (0) target = $region25
  $region24: #{gpt_forward.14} parent=0 // pred_region
    _
  $region25: #{gpt_forward.14} parent=0 // pred_fallthru
    _

// kernel: gpt_forward.12
$region0: #{gpt_forward.12}
  #allocation0 [shape = 'u32[]', space=smem, size = 0x4, offset = 0x4, fixed_abs, tag = 'smem constant byte address 0x4 - core index']
  #allocation1 [shape = 'u32[144,128]{1,0:T(1,128)}', space=vmem, size = 0x12000, scoped, tag = 'internal scratch']
  #allocation2 [shape = 'f32[8,8]{1,0:T(8,128)}', space=vmem, size = 0x1000, scoped, tag = 'scratch operand']
  #allocation3 [shape = 'f32[8,1]{1,0:T(8,128)}', space=vmem, size = 0x1000, scoped, tag = 'scratch operand']
  #allocation4 [shape = 'f32[8,1]{1,0:T(8,128)}', space=vmem, size = 0x1000, scoped, tag = 'scratch operand']
  #allocation5 [shape = 'f32[8,8]{1,0:T(8,128)}', space=vmem, size = 0x1000, scoped, tag = 'scratch operand']
  %s0 = inlined_call_operand.vmem [shape: bf16[2,4,8,8], index: 0, kind: input, shape index: {}]
  %s1 = inlined_call_operand.vmem [shape: bf16[2,4,8,8], index: 1, kind: input, shape index: {}]
  %s2 = inlined_call_operand.vmem [shape: bf16[2,4,8,8], index: 2, kind: input, shape index: {}]
  %s3 = inlined_call_operand.vmem [shape: f32[8,4], index: 3, kind: input, shape index: {}, may-alias: {3,5}]
  %s4 = inlined_call_operand.vmem [shape: f32[8,4], index: 4, kind: input, shape index: {}, may-alias: {4,6}]
  %s5 = inlined_call_operand.vmem [shape: f32[8,4], index: 5, kind: input, shape index: {}, may-alias: {3,5}]
  %s6 = inlined_call_operand.vmem [shape: f32[8,4], index: 6, kind: input, shape index: {}, may-alias: {4,6}]
  %s7 = inlined_call_operand.vmem [shape: bf16[2,4,8,8], index: 7, kind: output, shape index: {}]
  %s8 = sld [smem:[#allocation0]]
  $region73: #{gpt_forward.12} parent=0
    _
  %s10 = ssub.s32 1, %s8
  %s11 = scalar_select 0, %s10, %s8
  loop: start=0, step=1, limit=10
  $region2: #{gpt_forward.12} parent=0 // loop_pre_header
    _
  $region3: #{gpt_forward.12} parent=0 // loop_header
    %s13 = sphi 0, %s17
    %p14 = scmp.ge.s32.totalorder %s13, 10
    %s20 = sphi 0, %s46
    %s21 = sphi 0, %s42
    %s22 = sphi 0, %s38
    %s23 = sphi 0, %s34
    %s24 = sphi 0, %s20
    %s25 = sphi 0, %s21
    %s26 = sphi 0, %s22
    %s27 = sphi 0, %s23
    %s28 = sphi 0, %s24
    %s29 = sphi 0, %s25
    %s30 = sphi 0, %s26
    %s31 = sphi 0, %s27
    %s53 = sphi 0, %s55
    %s56 = sphi 0, %s53
    %s57 = sphi 0, %s56
    %s73 = sphi 0, %s57
    %s83 = sphi 0, %s85
    %s86 = sphi 0, %s83
    %s87 = sphi 0, %s86
    %s103 = sphi 0, %s87
    %s113 = sphi 0, %s115
    %s116 = sphi 0, %s113
    %s117 = sphi 0, %s116
    %s133 = sphi 0, %s117
    %s139 = sphi 0, %s141
    %s142 = sphi 0, %s139
    %s143 = sphi 0, %s142
    %s159 = sphi 0, %s143
    %s165 = sphi 0, %s167
    %s168 = sphi 0, %s165
    %s169 = sphi 0, %s168
    %s185 = sphi 0, %s169
    %s191 = sphi 0, %s193
    %s194 = sphi 0, %s191
    %s195 = sphi 0, %s194
    %s211 = sphi 0, %s195
    %s217 = sphi 0, %s219
    %s220 = sphi 0, %s217
    %s221 = sphi 0, %s220
    %s237 = sphi 0, %s221
    %s247 = sphi 0, %s249
    %s250 = sphi 0, %s247
    %s251 = sphi 0, %s250
    %s267 = sphi 0, %s251
  $region4: #{gpt_forward.12} parent=0 // loop_header_branch
    %16 = sbr.rel (%p14) target = $region8
  $region5: #{gpt_forward.12} parent=0 // loop_body
    %s18 = ssub.s32 %s13, 1
    %s19 = ssub.s32 %s13, 2
    %s32 = sadd.s32 1, %s23
    %p33 = scmp.ge.s32.totalorder %s32, 1
    %s34 = scalar_select %p33, 0, %s32
    %s35 = sadd.s32 1, %s22
    %s36 = scalar_select %p33, %s35, %s22
    %p37 = scmp.ge.s32.totalorder %s36, 1
    %s38 = scalar_select %p37, 0, %s36
    %s39 = sadd.s32 1, %s21
    %s40 = scalar_select %p37, %s39, %s21
    %p41 = scmp.ge.s32.totalorder %s40, 4
    %s42 = scalar_select %p41, 0, %s40
    %s43 = sadd.s32 1, %s20
    %s44 = scalar_select %p41, %s43, %s20
    %p45 = scmp.ge.s32.totalorder %s44, 2
    %s46 = scalar_select %p45, 0, %s44
    %s47 = ssub.s32 %s20, %s46
    %s48 = ssub.s32 %s21, %s42
    %s49 = sor.u32 %s47, %s48
    %s50 = ssub.s32 %s22, %s38
    %s51 = sor.u32 %s49, %s50
    %p52 = scmp.eq.s32.totalorder %s51, 0
    %s54 = sadd.s32 %s53, 1
    %s55 = scalar_select %p52, %s53, %s54
    %p58 = pneg %p52
    %p59 = scmp.eq.s32.totalorder %s13, 7
    %p60 = por %p58, %p59
    %p61 = scmp.ne.s32.totalorder %s53, %s56
    %p62 = scmp.eq.s32.totalorder %s13, 0
    %p63 = por %p61, %p62
    %p64 = scmp.ne.s32.totalorder %s53, %s56
    %p65 = scmp.eq.s32.totalorder %s18, 7
    %p66 = por %p64, %p65
    %p67 = scmp.ne.s32.totalorder %s56, %s57
    %p68 = scmp.eq.s32.totalorder %s18, 0
    %p69 = por %p67, %p68
    %p70 = scmp.ne.s32.totalorder %s56, %s57
    %p71 = scmp.eq.s32.totalorder %s19, 7
    %p72 = por %p70, %p71
    %p74 = scmp.ne.s32.totalorder %s57, %s73
    %p75 = scmp.eq.s32.totalorder %s19, 0
    %p76 = por %p74, %p75
    %s77 = ssub.s32 %s20, %s46
    %s78 = ssub.s32 %s21, %s42
    %s79 = sor.u32 %s77, %s78
    %s80 = ssub.s32 %s23, %s34
    %s81 = sor.u32 %s79, %s80
    %p82 = scmp.eq.s32.totalorder %s81, 0
    %s84 = sadd.s32 %s83, 1
    %s85 = scalar_select %p82, %s83, %s84
    %p88 = pneg %p82
    %p89 = scmp.eq.s32.totalorder %s13, 7
    %p90 = por %p88, %p89
    %p91 = scmp.ne.s32.totalorder %s83, %s86
    %p92 = scmp.eq.s32.totalorder %s13, 0
    %p93 = por %p91, %p92
    %p94 = scmp.ne.s32.totalorder %s83, %s86
    %p95 = scmp.eq.s32.totalorder %s18, 7
    %p96 = por %p94, %p95
    %p97 = scmp.ne.s32.totalorder %s86, %s87
    %p98 = scmp.eq.s32.totalorder %s18, 0
    %p99 = por %p97, %p98
    %p100 = scmp.ne.s32.totalorder %s86, %s87
    %p101 = scmp.eq.s32.totalorder %s19, 7
    %p102 = por %p100, %p101
    %p104 = scmp.ne.s32.totalorder %s87, %s103
    %p105 = scmp.eq.s32.totalorder %s19, 0
    %p106 = por %p104, %p105
    %s107 = ssub.s32 %s20, %s46
    %s108 = ssub.s32 %s21, %s42
    %s109 = sor.u32 %s107, %s108
    %s110 = ssub.s32 %s23, %s34
    %s111 = sor.u32 %s109, %s110
    %p112 = scmp.eq.s32.totalorder %s111, 0
    %s114 = sadd.s32 %s113, 1
    %s115 = scalar_select %p112, %s113, %s114
    %p118 = pneg %p112
    %p119 = scmp.eq.s32.totalorder %s13, 7
    %p120 = por %p118, %p119
    %p121 = scmp.ne.s32.totalorder %s113, %s116
    %p122 = scmp.eq.s32.totalorder %s13, 0
    %p123 = por %p121, %p122
    %p124 = scmp.ne.s32.totalorder %s113, %s116
    %p125 = scmp.eq.s32.totalorder %s18, 7
    %p126 = por %p124, %p125
    %p127 = scmp.ne.s32.totalorder %s116, %s117
    %p128 = scmp.eq.s32.totalorder %s18, 0
    %p129 = por %p127, %p128
    %p130 = scmp.ne.s32.totalorder %s116, %s117
    %p131 = scmp.eq.s32.totalorder %s19, 7
    %p132 = por %p130, %p131
    %p134 = scmp.ne.s32.totalorder %s117, %s133
    %p135 = scmp.eq.s32.totalorder %s19, 0
    %p136 = por %p134, %p135
    %s137 = ssub.s32 %s22, %s38
    %p138 = scmp.eq.s32.totalorder %s137, 0
    %s140 = sadd.s32 %s139, 1
    %s141 = scalar_select %p138, %s139, %s140
    %p144 = pneg %p138
    %p145 = scmp.eq.s32.totalorder %s13, 7
    %p146 = por %p144, %p145
    %p147 = scmp.ne.s32.totalorder %s139, %s142
    %p148 = scmp.eq.s32.totalorder %s13, 0
    %p149 = por %p147, %p148
    %p150 = scmp.ne.s32.totalorder %s139, %s142
    %p151 = scmp.eq.s32.totalorder %s18, 7
    %p152 = por %p150, %p151
    %p153 = scmp.ne.s32.totalorder %s142, %s143
    %p154 = scmp.eq.s32.totalorder %s18, 0
    %p155 = por %p153, %p154
    %p156 = scmp.ne.s32.totalorder %s142, %s143
    %p157 = scmp.eq.s32.totalorder %s19, 7
    %p158 = por %p156, %p157
    %p160 = scmp.ne.s32.totalorder %s143, %s159
    %p161 = scmp.eq.s32.totalorder %s19, 0
    %p162 = por %p160, %p161
    %s163 = ssub.s32 %s22, %s38
    %p164 = scmp.eq.s32.totalorder %s163, 0
    %s166 = sadd.s32 %s165, 1
    %s167 = scalar_select %p164, %s165, %s166
    %p170 = pneg %p164
    %p171 = scmp.eq.s32.totalorder %s13, 7
    %p172 = por %p170, %p171
    %p173 = scmp.ne.s32.totalorder %s165, %s168
    %p174 = scmp.eq.s32.totalorder %s13, 0
    %p175 = por %p173, %p174
    %p176 = scmp.ne.s32.totalorder %s165, %s168
    %p177 = scmp.eq.s32.totalorder %s18, 7
    %p178 = por %p176, %p177
    %p179 = scmp.ne.s32.totalorder %s168, %s169
    %p180 = scmp.eq.s32.totalorder %s18, 0
    %p181 = por %p179, %p180
    %p182 = scmp.ne.s32.totalorder %s168, %s169
    %p183 = scmp.eq.s32.totalorder %s19, 7
    %p184 = por %p182, %p183
    %p186 = scmp.ne.s32.totalorder %s169, %s185
    %p187 = scmp.eq.s32.totalorder %s19, 0
    %p188 = por %p186, %p187
    %s189 = ssub.s32 %s23, %s34
    %p190 = scmp.eq.s32.totalorder %s189, 0
    %s192 = sadd.s32 %s191, 1
    %s193 = scalar_select %p190, %s191, %s192
    %p196 = pneg %p190
    %p197 = scmp.eq.s32.totalorder %s13, 7
    %p198 = por %p196, %p197
    %p199 = scmp.ne.s32.totalorder %s191, %s194
    %p200 = scmp.eq.s32.totalorder %s13, 0
    %p201 = por %p199, %p200
    %p202 = scmp.ne.s32.totalorder %s191, %s194
    %p203 = scmp.eq.s32.totalorder %s18, 7
    %p204 = por %p202, %p203
    %p205 = scmp.ne.s32.totalorder %s194, %s195
    %p206 = scmp.eq.s32.totalorder %s18, 0
    %p207 = por %p205, %p206
    %p208 = scmp.ne.s32.totalorder %s194, %s195
    %p209 = scmp.eq.s32.totalorder %s19, 7
    %p210 = por %p208, %p209
    %p212 = scmp.ne.s32.totalorder %s195, %s211
    %p213 = scmp.eq.s32.totalorder %s19, 0
    %p214 = por %p212, %p213
    %s215 = ssub.s32 %s23, %s34
    %p216 = scmp.eq.s32.totalorder %s215, 0
    %s218 = sadd.s32 %s217, 1
    %s219 = scalar_select %p216, %s217, %s218
    %p222 = pneg %p216
    %p223 = scmp.eq.s32.totalorder %s13, 7
    %p224 = por %p222, %p223
    %p225 = scmp.ne.s32.totalorder %s217, %s220
    %p226 = scmp.eq.s32.totalorder %s13, 0
    %p227 = por %p225, %p226
    %p228 = scmp.ne.s32.totalorder %s217, %s220
    %p229 = scmp.eq.s32.totalorder %s18, 7
    %p230 = por %p228, %p229
    %p231 = scmp.ne.s32.totalorder %s220, %s221
    %p232 = scmp.eq.s32.totalorder %s18, 0
    %p233 = por %p231, %p232
    %p234 = scmp.ne.s32.totalorder %s220, %s221
    %p235 = scmp.eq.s32.totalorder %s19, 7
    %p236 = por %p234, %p235
    %p238 = scmp.ne.s32.totalorder %s221, %s237
    %p239 = scmp.eq.s32.totalorder %s19, 0
    %p240 = por %p238, %p239
    %s241 = ssub.s32 %s20, %s46
    %s242 = ssub.s32 %s21, %s42
    %s243 = sor.u32 %s241, %s242
    %s244 = ssub.s32 %s22, %s38
    %s245 = sor.u32 %s243, %s244
    %p246 = scmp.eq.s32.totalorder %s245, 0
    %s248 = sadd.s32 %s247, 1
    %s249 = scalar_select %p246, %s247, %s248
    %p252 = pneg %p246
    %p253 = scmp.eq.s32.totalorder %s13, 7
    %p254 = por %p252, %p253
    %p255 = scmp.ne.s32.totalorder %s247, %s250
    %p256 = scmp.eq.s32.totalorder %s13, 0
    %p257 = por %p255, %p256
    %p258 = scmp.ne.s32.totalorder %s247, %s250
    %p259 = scmp.eq.s32.totalorder %s18, 7
    %p260 = por %p258, %p259
    %p261 = scmp.ne.s32.totalorder %s250, %s251
    %p262 = scmp.eq.s32.totalorder %s18, 0
    %p263 = por %p261, %p262
    %p264 = scmp.ne.s32.totalorder %s250, %s251
    %p265 = scmp.eq.s32.totalorder %s19, 7
    %p266 = por %p264, %p265
    %p268 = scmp.ne.s32.totalorder %s251, %s267
    %p269 = scmp.eq.s32.totalorder %s19, 0
    %p270 = por %p268, %p269
    %p271 = scmp.le.s32.totalorder 1, %s13
    %p272 = scmp.lt.s32.totalorder %s13, 9
    %p273 = pnand %p271, %p272
    %p274 = pneg %p273
    // Predicated region
    $region9: #{gpt_forward.12} parent=5 // pred_check
      _
    $region10: #{gpt_forward.12} parent=5 // pred_check_branch
      %276 = sbr.rel (%p273) target = $region12
    $region11: #{gpt_forward.12} parent=5 // pred_region
      %s277 = ssub.s32 %s13, 1
      // Predicated region
      $region13: #{gpt_forward.12} parent=11 // pred_check
        %p278 = pneg %p155
      $region14: #{gpt_forward.12} parent=11 // pred_check_branch
        %280 = sbr.rel (%p278) target = $region16
      $region15: #{gpt_forward.12} parent=11 // pred_region
        %p281 = scmp.lt.s32.totalorder %s26, 0
        %s282 = scalar_select %p281, %s26, 0
        %s283 = smul.addr %s282, 8
        %s284 = scalar_lea.vmem %s3, %s283
      $region16: #{gpt_forward.12} parent=11 // pred_fallthru
        _
      // Predicated region
      $region17: #{gpt_forward.12} parent=11 // pred_check
        %p285 = pneg %p181
      $region18: #{gpt_forward.12} parent=11 // pred_check_branch
        %287 = sbr.rel (%p285) target = $region20
      $region19: #{gpt_forward.12} parent=11 // pred_region
        %p288 = scmp.lt.s32.totalorder %s26, 0
        %s289 = scalar_select %p288, %s26, 0
        %s290 = smul.addr %s289, 8
        %s291 = scalar_lea.vmem %s4, %s290
      $region20: #{gpt_forward.12} parent=11 // pred_fallthru
        _
      // Predicated region
      $region21: #{gpt_forward.12} parent=11 // pred_check
        %p292 = pneg %p207
      $region22: #{gpt_forward.12} parent=11 // pred_check_branch
        %294 = sbr.rel (%p292) target = $region24
      $region23: #{gpt_forward.12} parent=11 // pred_region
        %p295 = scmp.lt.s32.totalorder %s27, 0
        %s296 = scalar_select %p295, %s27, 0
        %s297 = smul.addr %s296, 8
        %s298 = scalar_lea.vmem %s5, %s297
      $region24: #{gpt_forward.12} parent=11 // pred_fallthru
        _
      // Predicated region
      $region25: #{gpt_forward.12} parent=11 // pred_check
        %p299 = pneg %p233
      $region26: #{gpt_forward.12} parent=11 // pred_check_branch
        %301 = sbr.rel (%p299) target = $region28
      $region27: #{gpt_forward.12} parent=11 // pred_region
        %p302 = scmp.lt.s32.totalorder %s27, 0
        %s303 = scalar_select %p302, %s27, 0
        %s304 = smul.addr %s303, 8
        %s305 = scalar_lea.vmem %s6, %s304
      $region28: #{gpt_forward.12} parent=11 // pred_fallthru
        _
    $region12: #{gpt_forward.12} parent=5 // pred_fallthru
      _
    %p306 = scmp.lt.s32.totalorder %s13, 8
    // Predicated region
    $region29: #{gpt_forward.12} parent=5 // pred_check
      %p307 = pneg %p306
    $region30: #{gpt_forward.12} parent=5 // pred_check_branch
      %309 = sbr.rel (%p307) target = $region32
    $region31: #{gpt_forward.12} parent=5 // pred_region
      // Predicated region
      $region33: #{gpt_forward.12} parent=31 // pred_check
        %p310 = pneg %p63
      $region34: #{gpt_forward.12} parent=31 // pred_check_branch
        %312 = sbr.rel (%p310) target = $region36
      $region35: #{gpt_forward.12} parent=31 // pred_region
        %p313 = scmp.lt.s32.totalorder %s20, 1
        %s314 = scalar_select %p313, %s20, 1
        %p315 = scmp.lt.s32.totalorder %s21, 3
        %s316 = scalar_select %p315, %s21, 3
        %p317 = scmp.lt.s32.totalorder %s22, 0
        %s318 = scalar_select %p317, %s22, 0
        %s319 = sadd.s32 %s318, %s316
        %s320 = smul.addr %s314, 4
        %s321 = sadd.s32 %s319, %s320
        %s322 = smul.addr %s321, 4
        %s323 = scalar_lea.vmem %s0, %s322
      $region36: #{gpt_forward.12} parent=31 // pred_fallthru
        _
      // Predicated region
      $region37: #{gpt_forward.12} parent=31 // pred_check
        %p324 = pneg %p93
      $region38: #{gpt_forward.12} parent=31 // pred_check_branch
        %326 = sbr.rel (%p324) target = $region40
      $region39: #{gpt_forward.12} parent=31 // pred_region
        %p327 = scmp.lt.s32.totalorder %s20, 1
        %s328 = scalar_select %p327, %s20, 1
        %p329 = scmp.lt.s32.totalorder %s21, 3
        %s330 = scalar_select %p329, %s21, 3
        %p331 = scmp.lt.s32.totalorder %s23, 0
        %s332 = scalar_select %p331, %s23, 0
        %s333 = sadd.s32 %s332, %s330
        %s334 = smul.addr %s328, 4
        %s335 = sadd.s32 %s333, %s334
        %s336 = smul.addr %s335, 4
        %s337 = scalar_lea.vmem %s1, %s336
      $region40: #{gpt_forward.12} parent=31 // pred_fallthru
        _
      // Predicated region
      $region41: #{gpt_forward.12} parent=31 // pred_check
        %p338 = pneg %p123
      $region42: #{gpt_forward.12} parent=31 // pred_check_branch
        %340 = sbr.rel (%p338) target = $region44
      $region43: #{gpt_forward.12} parent=31 // pred_region
        %p341 = scmp.lt.s32.totalorder %s20, 1
        %s342 = scalar_select %p341, %s20, 1
        %p343 = scmp.lt.s32.totalorder %s21, 3
        %s344 = scalar_select %p343, %s21, 3
        %p345 = scmp.lt.s32.totalorder %s23, 0
        %s346 = scalar_select %p345, %s23, 0
        %s347 = sadd.s32 %s346, %s344
        %s348 = smul.addr %s342, 4
        %s349 = sadd.s32 %s347, %s348
        %s350 = smul.addr %s349, 4
        %s351 = scalar_lea.vmem %s2, %s350
      $region44: #{gpt_forward.12} parent=31 // pred_fallthru
        _
    $region32: #{gpt_forward.12} parent=5 // pred_fallthru
      _
    %p352 = scmp.le.s32.totalorder 1, %s13
    %p353 = scmp.lt.s32.totalorder %s13, 9
    %p354 = pnand %p352, %p353
    %p355 = pneg %p354
    // Predicated region
    $region45: #{gpt_forward.12} parent=5 // pred_check
      _
    $region46: #{gpt_forward.12} parent=5 // pred_check_branch
      %357 = sbr.rel (%p354) target = $region48
    $region47: #{gpt_forward.12} parent=5 // pred_region
      %s358 = ssub.s32 %s13, 1
      %p359 = scmp.lt.s32.totalorder %s24, 1
      %s360 = scalar_select %p359, %s24, 1
      %p361 = scmp.lt.s32.totalorder %s25, 3
      %s362 = scalar_select %p361, %s25, 3
      %p363 = scmp.lt.s32.totalorder %s26, 0
      %s364 = scalar_select %p363, %s26, 0
      %s365 = sadd.s32 %s364, %s362
      %s366 = smul.addr %s360, 4
      %s367 = sadd.s32 %s365, %s366
      %s368 = smul.addr %s367, 4
      %s369 = scalar_lea.vmem %s0, %s368
      %p370 = pneg %p69
      %p371 = pneg %p66
      %p372 = scmp.lt.s32.totalorder %s24, 1
      %s373 = scalar_select %p372, %s24, 1
      %p374 = scmp.lt.s32.totalorder %s25, 3
      %s375 = scalar_select %p374, %s25, 3
      %p376 = scmp.lt.s32.totalorder %s27, 0
      %s377 = scalar_select %p376, %s27, 0
      %s378 = sadd.s32 %s377, %s375
      %s379 = smul.addr %s373, 4
      %s380 = sadd.s32 %s378, %s379
      %s381 = smul.addr %s380, 4
      %s382 = scalar_lea.vmem %s1, %s381
      %p383 = pneg %p99
      %p384 = pneg %p96
      %p385 = scmp.lt.s32.totalorder %s24, 1
      %s386 = scalar_select %p385, %s24, 1
      %p387 = scmp.lt.s32.totalorder %s25, 3
      %s388 = scalar_select %p387, %s25, 3
      %p389 = scmp.lt.s32.totalorder %s27, 0
      %s390 = scalar_select %p389, %s27, 0
      %s391 = sadd.s32 %s390, %s388
      %s392 = smul.addr %s386, 4
      %s393 = sadd.s32 %s391, %s392
      %s394 = smul.addr %s393, 4
      %s395 = scalar_lea.vmem %s2, %s394
      %p396 = pneg %p129
      %p397 = pneg %p126
      %p398 = scmp.lt.s32.totalorder %s26, 0
      %s399 = scalar_select %p398, %s26, 0
      %s400 = smul.addr %s399, 8
      %s401 = scalar_lea.vmem %s3, %s400
      %p402 = pneg %p155
      %p403 = pneg %p152
      %p404 = scmp.lt.s32.totalorder %s26, 0
      %s405 = scalar_select %p404, %s26, 0
      %s406 = smul.addr %s405, 8
      %s407 = scalar_lea.vmem %s4, %s406
      %p408 = pneg %p181
      %p409 = pneg %p178
      %p410 = scmp.lt.s32.totalorder %s27, 0
      %s411 = scalar_select %p410, %s27, 0
      %s412 = smul.addr %s411, 8
      %s413 = scalar_lea.vmem %s5, %s412
      %p414 = pneg %p207
      %p415 = pneg %p204
      %p416 = scmp.lt.s32.totalorder %s27, 0
      %s417 = scalar_select %p416, %s27, 0
      %s418 = smul.addr %s417, 8
      %s419 = scalar_lea.vmem %s6, %s418
      %p420 = pneg %p233
      %p421 = pneg %p230
      %p422 = pneg %p263
      %p423 = pneg %p260
      %p424 = scmp.lt.s32.totalorder %s24, 1
      %s425 = scalar_select %p424, %s24, 1
      %p426 = scmp.lt.s32.totalorder %s25, 3
      %s427 = scalar_select %p426, %s25, 3
      %p428 = scmp.lt.s32.totalorder %s26, 0
      %s429 = scalar_select %p428, %s26, 0
      %s430 = sadd.s32 %s429, %s427
      %s431 = smul.addr %s425, 4
      %s432 = sadd.s32 %s430, %s431
      %s433 = smul.addr %s432, 4
      %s434 = scalar_lea.vmem %s7, %s433
      %p435 = scmp.lt.s32.totalorder %s24, 1
      %s436 = scalar_select %p435, %s24, 1
      %p437 = scmp.lt.s32.totalorder %s25, 3
      %s438 = scalar_select %p437, %s25, 3
      %p439 = scmp.lt.s32.totalorder %s26, 0
      %s440 = scalar_select %p439, %s26, 0
      %s441 = sadd.s32 %s440, %s438
      %s442 = smul.addr %s436, 4
      %s443 = sadd.s32 %s441, %s442
      %s444 = smul.addr %s443, 4
      %s445 = scalar_lea.vmem %s0, %s444
      %p446 = scmp.lt.s32.totalorder %s24, 1
      %s447 = scalar_select %p446, %s24, 1
      %p448 = scmp.lt.s32.totalorder %s25, 3
      %s449 = scalar_select %p448, %s25, 3
      %p450 = scmp.lt.s32.totalorder %s27, 0
      %s451 = scalar_select %p450, %s27, 0
      %s452 = sadd.s32 %s451, %s449
      %s453 = smul.addr %s447, 4
      %s454 = sadd.s32 %s452, %s453
      %s455 = smul.addr %s454, 4
      %s456 = scalar_lea.vmem %s1, %s455
      %p457 = scmp.lt.s32.totalorder %s24, 1
      %s458 = scalar_select %p457, %s24, 1
      %p459 = scmp.lt.s32.totalorder %s25, 3
      %s460 = scalar_select %p459, %s25, 3
      %p461 = scmp.lt.s32.totalorder %s27, 0
      %s462 = scalar_select %p461, %s27, 0
      %s463 = sadd.s32 %s462, %s460
      %s464 = smul.addr %s458, 4
      %s465 = sadd.s32 %s463, %s464
      %s466 = smul.addr %s465, 4
      %s467 = scalar_lea.vmem %s2, %s466
      %p468 = scmp.lt.s32.totalorder %s26, 0
      %s469 = scalar_select %p468, %s26, 0
      %s470 = smul.addr %s469, 8
      %s471 = scalar_lea.vmem %s3, %s470
      %p472 = scmp.lt.s32.totalorder %s26, 0
      %s473 = scalar_select %p472, %s26, 0
      %s474 = smul.addr %s473, 8
      %s475 = scalar_lea.vmem %s4, %s474
      %p476 = scmp.lt.s32.totalorder %s27, 0
      %s477 = scalar_select %p476, %s27, 0
      %s478 = smul.addr %s477, 8
      %s479 = scalar_lea.vmem %s5, %s478
      %p480 = scmp.lt.s32.totalorder %s27, 0
      %s481 = scalar_select %p480, %s27, 0
      %s482 = smul.addr %s481, 8
      %s483 = scalar_lea.vmem %s6, %s482
      %p484 = scmp.lt.s32.totalorder %s24, 1
      %s485 = scalar_select %p484, %s24, 1
      %p486 = scmp.lt.s32.totalorder %s25, 3
      %s487 = scalar_select %p486, %s25, 3
      %p488 = scmp.lt.s32.totalorder %s26, 0
      %s489 = scalar_select %p488, %s26, 0
      %s490 = sadd.s32 %s489, %s487
      %s491 = smul.addr %s485, 4
      %s492 = sadd.s32 %s490, %s491
      %s493 = smul.addr %s492, 4
      %s494 = scalar_lea.vmem %s7, %s493
      %s496 = smul.u32 %s26, 8
      %s497 = smul.u32 %s27, 8
      %p498 = scmp.eq.s32.totalorder %s27, 0
      // Predicated region
      $region49: #{gpt_forward.12} parent=47 // pred_check
        %p499 = pneg %p498
      $region50: #{gpt_forward.12} parent=47 // pred_check_branch
        %501 = sbr.rel (%p499) target = $region52
      $region51: #{gpt_forward.12} parent=47 // pred_region
        %vm502 = vcmask 7168
        %503 = vst.msk [vmem:[#allocation3] sm:$0xff] %vm502, -1e+30
        %504 = vst.msk [vmem:[#allocation4] sm:$0xff] %vm502, 0.0
        %vm505 = vcmask 64512
        %506 = vst.msk [vmem:[#allocation5] sm:$0xff] %vm505, 0.0
        %v507 = vld [vmem:[%s445] sm:$0xf]
        %v508 = vunpack.c.l.bf16 %v507
        %v509 = vld [vmem:[%s471] sm:$0xff]
        %v510 = vld [vmem:[%s475] sm:$0xff]
        %v511 = vmul.f32 %v508, %v509
        %513 = vrot.lane.b32.xlu0 %v510, 4
        %v514 = vpop.permute.xlu0 %513
        %v516 = vmul.f32 %v508, %v514
        %518 = vrot.lane.b32.xlu0 %v516, 124
        %v519 = vpop.permute.xlu0 %518
        %v521 = vsub.f32 %v511, %v519
        %523 = vrot.lane.b32.xlu0 %v509, 4
        %v524 = vpop.permute.xlu0 %523
        %v526 = vmul.f32 %v508, %v524
        %v527 = vmul.f32 %v521, %v510
        %529 = vrot.lane.b32.xlu0 %v527, 4
        %v530 = vpop.permute.xlu0 %529
        %v532 = vadd.f32 %v526, %v530
        %v533 = vmax.f32 %v521, -100.0
        %v534 = vmin.f32 %v533, 100.0
        %v535 = vmul.f32 %v534, 0.35355338
        %vm536 = vcmask 31744
        %537 = vst.msk [vmem:[#allocation2] sm:$0xff] %vm536, %v535
        %v538 = vmax.f32 %v532, -100.0
        %v539 = vmin.f32 %v538, 100.0
        %v540 = vmul.f32 %v539, 0.35355338
        %vm541 = vcmask 64544
        %542 = vst.msk [vmem:[#allocation2] sm:$0xff] %vm541, %v540
      $region52: #{gpt_forward.12} parent=47 // pred_fallthru
        _
      %s543 = sadd.s32 %s496, 7
      %p544 = scmp.le.s32.totalorder %s497, %s543
      // Predicated region
      $region53: #{gpt_forward.12} parent=47 // pred_check
        %p545 = pneg %p544
      $region54: #{gpt_forward.12} parent=47 // pred_check_branch
        %547 = sbr.rel (%p545) target = $region56
      $region55: #{gpt_forward.12} parent=47 // pred_region
        %v548 = vld [vmem:[%s456] sm:$0xf]
        %v549 = vunpack.c.l.bf16 %v548
        %v550 = vld [vmem:[%s479] sm:$0xff]
        %v551 = vld [vmem:[%s483] sm:$0xff]
        %v552 = vmul.f32 %v549, %v550
        %554 = vrot.lane.b32.xlu0 %v551, 4
        %v555 = vpop.permute.xlu0 %554
        %v557 = vmul.f32 %v549, %v555
        %559 = vrot.lane.b32.xlu0 %v557, 124
        %v560 = vpop.permute.xlu0 %559
        %v562 = vsub.f32 %v552, %v560
        %564 = vrot.lane.b32.xlu0 %v550, 4
        %v565 = vpop.permute.xlu0 %564
        %v567 = vmul.f32 %v549, %v565
        %v568 = vmul.f32 %v562, %v551
        %570 = vrot.lane.b32.xlu0 %v568, 4
        %v571 = vpop.permute.xlu0 %570
        %v573 = vadd.f32 %v567, %v571
        %v574 = vmax.f32 %v562, -100.0
        %v575 = vmin.f32 %v574, 100.0
        %v576 = vpack.c.bf16 %v575, %v575
        %v577 = vmax.f32 %v573, -100.0
        %v578 = vmin.f32 %v577, 100.0
        %v579 = vpack.c.bf16 %v578, %v578
        %v580 = vld [vmem:[%s467] sm:$0xf]
        %v581 = vunpack.c.l.bf16 %v580
        %v582 = vmax.f32 %v581, -100.0
        %v583 = vmin.f32 %v582, 100.0
        %v584 = vpack.c.bf16 %v583, %v583
        %v585 = vld [vmem:[#allocation2] sm:$0xff]
        %v586 = vpack.c.bf16 %v585, %v585
        %588 = vrot.lane.b32.xlu0 %v586, 124
        %v589 = vpop.permute.xlu0 %588
        %591 = vrot.lane.b32.xlu0 %v579, 124
        %v592 = vpop.permute.xlu0 %591
        %vm593 = vcmask 31744
        %v595 = vsel %vm593, %v589, 0
        %v598 = vsel %vm593, %v592, 0
        %600 = vmatprep.subr.bf16.mxu0 0
        %601 = vmatpush1.bf16.xpose.msra.mxu0 %v598
        %602 = vmatprep.subr.bf16.mxu0 0
        %603 = vmatpush1.bf16.xpose.msra.mxu0 0
        %604 = vmatprep.subr.bf16.mxu0 0
        %605 = vmatpush1.bf16.xpose.msra.mxu0 0
        %606 = vmatprep.subr.bf16.mxu0 0
        %607 = vmatpush1.bf16.xpose.msra.mxu0 0
        %608 = vmatprep.subr.bf16.mxu0 0
        %609 = vmatpush1.bf16.xpose.msra.mxu0 0
        %610 = vmatprep.subr.bf16.mxu0 0
        %611 = vmatpush1.bf16.xpose.msra.mxu0 0
        %612 = vmatprep.subr.bf16.mxu0 0
        %613 = vmatpush1.bf16.xpose.msra.mxu0 0
        %614 = vmatprep.subr.bf16.mxu0 0
        %615 = vmatpush1.bf16.xpose.msra.mxu0 0
        %616 = vmatprep.subr.bf16.mxu0 0
        %617 = vmatpush1.bf16.xpose.msra.mxu0 0
        %618 = vmatprep.subr.bf16.mxu0 0
        %619 = vmatpush1.bf16.xpose.msra.mxu0 0
        %620 = vmatprep.subr.bf16.mxu0 0
        %621 = vmatpush1.bf16.xpose.msra.mxu0 0
        %622 = vmatprep.subr.bf16.mxu0 0
        %623 = vmatpush1.bf16.xpose.msra.mxu0 0
        %624 = vmatprep.subr.bf16.mxu0 0
        %625 = vmatpush1.bf16.xpose.msra.mxu0 0
        %626 = vmatprep.subr.bf16.mxu0 0
        %627 = vmatpush1.bf16.xpose.msra.mxu0 0
        %628 = vmatprep.subr.bf16.mxu0 0
        %629 = vmatpush1.bf16.xpose.msra.mxu0 0
        %630 = vmatprep.subr.bf16.mxu0 0
        %631 = vmatpush1.bf16.xpose.msra.mxu0 0
        %632 = vmatprep.mubr.bf16.mxu0 0
        %633 = vmatmul.mubr.bf16.gmra.mrb[0].mxu0 %v595
        %v634 = vpop.f32.mrb[0].mxu0
        %v635 = vadd.f32 0.0, %v634
        %v636 = vpop.f32.mrb[0].mxu0
        %v637 = vpop.f32.mrb[0].mxu0
        %v638 = vpop.f32.mrb[0].mxu0
        %639 = vdwg.mxu0
        %v641 = vsel %vm593, %v586, 0
        %v644 = vsel %vm593, %v576, 0
        %646 = vmatprep.subr.bf16.mxu0 0
        %647 = vmatpush1.bf16.xpose.msra.mxu0 %v644
        %648 = vmatprep.subr.bf16.mxu0 0
        %649 = vmatpush1.bf16.xpose.msra.mxu0 0
        %650 = vmatprep.subr.bf16.mxu0 0
        %651 = vmatpush1.bf16.xpose.msra.mxu0 0
        %652 = vmatprep.subr.bf16.mxu0 0
        %653 = vmatpush1.bf16.xpose.msra.mxu0 0
        %654 = vmatprep.subr.bf16.mxu0 0
        %655 = vmatpush1.bf16.xpose.msra.mxu0 0
        %656 = vmatprep.subr.bf16.mxu0 0
        %657 = vmatpush1.bf16.xpose.msra.mxu0 0
        %658 = vmatprep.subr.bf16.mxu0 0
        %659 = vmatpush1.bf16.xpose.msra.mxu0 0
        %660 = vmatprep.subr.bf16.mxu0 0
        %661 = vmatpush1.bf16.xpose.msra.mxu0 0
        %662 = vmatprep.subr.bf16.mxu0 0
        %663 = vmatpush1.bf16.xpose.msra.mxu0 0
        %664 = vmatprep.subr.bf16.mxu0 0
        %665 = vmatpush1.bf16.xpose.msra.mxu0 0
        %666 = vmatprep.subr.bf16.mxu0 0
        %667 = vmatpush1.bf16.xpose.msra.mxu0 0
        %668 = vmatprep.subr.bf16.mxu0 0
        %669 = vmatpush1.bf16.xpose.msra.mxu0 0
        %670 = vmatprep.subr.bf16.mxu0 0
        %671 = vmatpush1.bf16.xpose.msra.mxu0 0
        %672 = vmatprep.subr.bf16.mxu0 0
        %673 = vmatpush1.bf16.xpose.msra.mxu0 0
        %674 = vmatprep.subr.bf16.mxu0 0
        %675 = vmatpush1.bf16.xpose.msra.mxu0 0
        %676 = vmatprep.subr.bf16.mxu0 0
        %677 = vmatpush1.bf16.xpose.msra.mxu0 0
        %678 = vmatprep.mubr.bf16.mxu0 0
        %679 = vmatmul.mubr.bf16.gmra.mrb[0].mxu0 %v641
        %v680 = vpop.f32.mrb[0].mxu0
        %v681 = vadd.f32 %v635, %v680
        %v682 = vpop.f32.mrb[0].mxu0
        %v683 = vpop.f32.mrb[0].mxu0
        %v684 = vpop.f32.mrb[0].mxu0
        %685 = vdwg.mxu0
        %v686 = vlaneseq
        %v687 = vshrl.u32 %v686, 7
        %v688 = vstv %s496
        %v689 = vadd.s32 %v688, %v687
        %v690 = vlaneseq
        %v691 = vand.u32 %v690, 127
        %v692 = vstv %s497
        %v693 = vadd.s32 %v692, %v691
        %vm694 = vcmp.le.s32.totalorder %v693, %v689
        %v695 = vsel %vm694, %v681, -1e+30
        %v696 = vld [vmem:[#allocation3] sm:$0xff]
        %vm697 = vcmask 64512
        %v698 = vsel %vm697, %v695, -inf
        %699 = vmax.xlane.f32.xlu0 %v698
        %v700 = vpop.xlane.xlu0 %699
        %v701 = vmax.f32 %v696, %v700
        %v702 = vsub.f32 %v696, %v701
        %v703 = vmul.f32 %v702, 1.442695
        %v704 = vpow.pop %v703
        %706 = vset.pattern.permute.xlu0 0
        %707 = vperm.xlu0 %706, %v701
        %v708 = vpop.permute.xlu0 %707
        %v710 = vsub.f32 %v695, %v708
        %v711 = vmul.f32 %v710, 1.442695
        %v712 = vpow.pop %v711
        %v713 = vld [vmem:[#allocation4] sm:$0xff]
        %v714 = vmul.f32 %v704, %v713
        %v715 = vsel %vm697, %v712, 0.0
        %716 = vadd.xlane.f32.xlu0 %v715
        %v717 = vpop.xlane.xlu0 %716
        %v718 = vadd.f32 %v714, %v717
        %vm719 = vcmask 7168
        %720 = vst.msk [vmem:[#allocation4] sm:$0xff] %vm719, %v718
        %v721 = vld [vmem:[#allocation5] sm:$0xff]
        %723 = vset.pattern.permute.xlu0 0
        %724 = vperm.xlu0 %723, %v704
        %v725 = vpop.permute.xlu0 %724
        %v727 = vmul.f32 %v725, %v721
        %v728 = vpack.c.bf16 %v712, %v712
        %v730 = vsel %vm697, %v728, 0
        %vm732 = vcmask 1043456
        %v734 = vsel %vm732, %v584, 0
        %736 = vmatprep.subr.bf16.mxu0 0
        %737 = vmatpush1.bf16.msra.mxu0 %v734
        %738 = vmatprep.subr.bf16.mxu0 0
        %739 = vmatpush1.bf16.msra.mxu0 0
        %740 = vmatprep.subr.bf16.mxu0 0
        %741 = vmatpush1.bf16.msra.mxu0 0
        %742 = vmatprep.subr.bf16.mxu0 0
        %743 = vmatpush1.bf16.msra.mxu0 0
        %744 = vmatprep.subr.bf16.mxu0 0
        %745 = vmatpush1.bf16.msra.mxu0 0
        %746 = vmatprep.subr.bf16.mxu0 0
        %747 = vmatpush1.bf16.msra.mxu0 0
        %748 = vmatprep.subr.bf16.mxu0 0
        %749 = vmatpush1.bf16.msra.mxu0 0
        %750 = vmatprep.subr.bf16.mxu0 0
        %751 = vmatpush1.bf16.msra.mxu0 0
        %752 = vmatprep.subr.bf16.mxu0 0
        %753 = vmatpush1.bf16.msra.mxu0 0
        %754 = vmatprep.subr.bf16.mxu0 0
        %755 = vmatpush1.bf16.msra.mxu0 0
        %756 = vmatprep.subr.bf16.mxu0 0
        %757 = vmatpush1.bf16.msra.mxu0 0
        %758 = vmatprep.subr.bf16.mxu0 0
        %759 = vmatpush1.bf16.msra.mxu0 0
        %760 = vmatprep.subr.bf16.mxu0 0
        %761 = vmatpush1.bf16.msra.mxu0 0
        %762 = vmatprep.subr.bf16.mxu0 0
        %763 = vmatpush1.bf16.msra.mxu0 0
        %764 = vmatprep.subr.bf16.mxu0 0
        %765 = vmatpush1.bf16.msra.mxu0 0
        %766 = vmatprep.subr.bf16.mxu0 0
        %767 = vmatpush1.bf16.msra.mxu0 0
        %768 = vmatprep.mubr.bf16.mxu0 0
        %769 = vmatmul.mubr.bf16.gmra.mrb[0].mxu0 %v730
        %v770 = vpop.f32.mrb[0].mxu0
        %v771 = vadd.f32 0.0, %v770
        %v772 = vpop.f32.mrb[0].mxu0
        %v773 = vpop.f32.mrb[0].mxu0
        %v774 = vpop.f32.mrb[0].mxu0
        %775 = vdwg.mxu0
        %v776 = vadd.f32 %v727, %v771
        %777 = vst.msk [vmem:[#allocation5] sm:$0xff] %vm697, %v776
        %778 = vst.msk [vmem:[#allocation3] sm:$0xff] %vm719, %v701
      $region56: #{gpt_forward.12} parent=47 // pred_fallthru
        _
      // Predicated region
      $region57: #{gpt_forward.12} parent=47 // pred_check
        %p779 = pneg %p498
      $region58: #{gpt_forward.12} parent=47 // pred_check_branch
        %781 = sbr.rel (%p779) target = $region60
      $region59: #{gpt_forward.12} parent=47 // pred_region
        %v782 = vld [vmem:[#allocation4] sm:$0xff]
        %v783 = vrcp.pop %v782
        %v784 = vld [vmem:[#allocation5] sm:$0xff]
        %786 = vset.pattern.permute.xlu0 0
        %787 = vperm.xlu0 %786, %v783
        %v788 = vpop.permute.xlu0 %787
        %v790 = vmul.f32 %v784, %v788
        %v791 = vpack.c.bf16 %v790, %v790
        %vm792 = vcmask 60416
        %793 = vst.msk [vmem:[%s494] sm:$0xf] %vm792, %v791
      $region60: #{gpt_forward.12} parent=47 // pred_fallthru
        _
      %p794 = scmp.lt.s32.totalorder %s24, 1
      %s795 = scalar_select %p794, %s24, 1
      %p796 = scmp.lt.s32.totalorder %s25, 3
      %s797 = scalar_select %p796, %s25, 3
      %p798 = scmp.lt.s32.totalorder %s26, 0
      %s799 = scalar_select %p798, %s26, 0
      %s800 = sadd.s32 %s799, %s797
      %s801 = smul.addr %s795, 4
      %s802 = sadd.s32 %s800, %s801
      %s803 = smul.addr %s802, 4
      %s804 = scalar_lea.vmem %s7, %s803
      // Predicated region
      $region61: #{gpt_forward.12} parent=47 // pred_check
        %p805 = pneg %p260
      $region62: #{gpt_forward.12} parent=47 // pred_check_branch
        %807 = sbr.rel (%p805) target = $region64
      $region63: #{gpt_forward.12} parent=47 // pred_region
        _
      $region64: #{gpt_forward.12} parent=47 // pred_fallthru
        _
    $region48: #{gpt_forward.12} parent=5 // pred_fallthru
      _
    %p808 = scmp.le.s32.totalorder 2, %s13
    // Predicated region
    $region65: #{gpt_forward.12} parent=5 // pred_check
      %p809 = pneg %p808
    $region66: #{gpt_forward.12} parent=5 // pred_check_branch
      %811 = sbr.rel (%p809) target = $region68
    $region67: #{gpt_forward.12} parent=5 // pred_region
      %s812 = ssub.s32 %s13, 2
      // Predicated region
      $region69: #{gpt_forward.12} parent=67 // pred_check
        %p813 = pneg %p266
      $region70: #{gpt_forward.12} parent=67 // pred_check_branch
        %815 = sbr.rel (%p813) target = $region72
      $region71: #{gpt_forward.12} parent=67 // pred_region
        %p816 = scmp.lt.s32.totalorder %s28, 1
        %s817 = scalar_select %p816, %s28, 1
        %p818 = scmp.lt.s32.totalorder %s29, 3
        %s819 = scalar_select %p818, %s29, 3
        %p820 = scmp.lt.s32.totalorder %s30, 0
        %s821 = scalar_select %p820, %s30, 0
        %s822 = sadd.s32 %s821, %s819
        %s823 = smul.addr %s817, 4
        %s824 = sadd.s32 %s822, %s823
        %s825 = smul.addr %s824, 4
        %s826 = scalar_lea.vmem %s7, %s825
      $region72: #{gpt_forward.12} parent=67 // pred_fallthru
        _
    $region68: #{gpt_forward.12} parent=5 // pred_fallthru
      _
  $region6: #{gpt_forward.12} parent=0 // loop_footer
    %s17 = sadd.s32 1, %s13
  $region7: #{gpt_forward.12} parent=0 // loop_footer_branch
    %12 = sbr.rel target = $region3
  $region8: #{gpt_forward.12} parent=0 // loop_exit
    _

// kernel: gpt_forward.15
$region0: #{gpt_forward.15}
  #allocation0 [shape = 'u32[]', space=smem, size = 0x4, offset = 0x4, fixed_abs, tag = 'smem constant byte address 0x4 - core index']
  #allocation1 [shape = 'u32[144,128]{1,0:T(1,128)}', space=vmem, size = 0x12000, scoped, tag = 'internal scratch']
  #allocation2 [shape = 'f32[16,32]{1,0:T(8,128)}', space=vmem, size = 0x2000, scoped, tag = 'scratch operand']
  %s0 = inlined_call_operand.vmem [shape: bf16[16,128], index: 0, kind: input, shape index: {}]
  %s1 = inlined_call_operand.vmem [shape: bf16[128,32], index: 1, kind: input, shape index: {}]
  %s2 = inlined_call_operand.vmem [shape: f32[16,32], index: 2, kind: input, shape index: {}]
  %s3 = inlined_call_operand.vmem [shape: f32[16,32], index: 3, kind: output, shape index: {}]
  %s4 = sld [smem:[#allocation0]]
  $region30: #{gpt_forward.15} parent=0
    _
  %s6 = ssub.s32 1, %s4
  %s7 = scalar_select 0, %s6, %s4
  // Predicated region
  $region2: #{gpt_forward.15} parent=0 // pred_check
    _
  $region3: #{gpt_forward.15} parent=0 // pred_check_branch
    %9 = sbr.rel (0) target = $region5
  $region4: #{gpt_forward.15} parent=0 // pred_region
    _
  $region5: #{gpt_forward.15} parent=0 // pred_fallthru
    _
  // Predicated region
  $region6: #{gpt_forward.15} parent=0 // pred_check
    _
  $region7: #{gpt_forward.15} parent=0 // pred_check_branch
    %11 = sbr.rel (0) target = $region9
  $region8: #{gpt_forward.15} parent=0 // pred_region
    _
  $region9: #{gpt_forward.15} parent=0 // pred_fallthru
    _
  // Predicated region
  $region10: #{gpt_forward.15} parent=0 // pred_check
    _
  $region11: #{gpt_forward.15} parent=0 // pred_check_branch
    %13 = sbr.rel (0) target = $region13
  $region12: #{gpt_forward.15} parent=0 // pred_region
    _
  $region13: #{gpt_forward.15} parent=0 // pred_fallthru
    _
  %p15 = scmp.eq.s32.totalorder 0, 0
  // Predicated region
  $region14: #{gpt_forward.15} parent=0 // pred_check
    %p16 = pneg %p15
  $region15: #{gpt_forward.15} parent=0 // pred_check_branch
    %18 = sbr.rel (%p16) target = $region17
  $region16: #{gpt_forward.15} parent=0 // pred_region
    %vm19 = vcmask 261120
    %20 = vst.msk [vmem:[#allocation2] sm:$0xff] %vm19, 0.0
    %21 = vst.msk [vmem:[#allocation2 + $0x8] sm:$0xff] %vm19, 0.0
  $region17: #{gpt_forward.15} parent=0 // pred_fallthru
    _
  %v22 = vld [vmem:[#allocation2] sm:$0xff]
  %v23 = vld [vmem:[#allocation2 + $0x8] sm:$0xff]
  %v24 = vld [vmem:[%s0] sm:$0xf]
  %v25 = vld [vmem:[%s0 + $0x4] sm:$0xf]
  %v26 = vld [vmem:[%s1] sm:$0xf]
  %v27 = vld [vmem:[%s1 + $0x4] sm:$0xf]
  %v28 = vld [vmem:[%s1 + $0x8] sm:$0xf]
  %v29 = vld [vmem:[%s1 + $0xc] sm:$0xf]
  %v30 = vld [vmem:[%s1 + $0x10] sm:$0xf]
  %v31 = vld [vmem:[%s1 + $0x14] sm:$0xf]
  %v32 = vld [vmem:[%s1 + $0x18] sm:$0xf]
  %v33 = vld [vmem:[%s1 + $0x1c] sm:$0xf]
  %v34 = vld [vmem:[%s1 + $0x20] sm:$0xf]
  %v35 = vld [vmem:[%s1 + $0x24] sm:$0xf]
  %v36 = vld [vmem:[%s1 + $0x28] sm:$0xf]
  %v37 = vld [vmem:[%s1 + $0x2c] sm:$0xf]
  %v38 = vld [vmem:[%s1 + $0x30] sm:$0xf]
  %v39 = vld [vmem:[%s1 + $0x34] sm:$0xf]
  %v40 = vld [vmem:[%s1 + $0x38] sm:$0xf]
  %v41 = vld [vmem:[%s1 + $0x3c] sm:$0xf]
  %v44 = vunpack.c.l.b16 %v24
  %v45 = vunpack.c.l.b16 %v25
  %v46 = vpack.c.b16 %v45, %v44
  %v64 = vunpack.c.l.b16 %v26
  %v65 = vunpack.c.l.b16 %v27
  %v66 = vunpack.c.l.b16 %v28
  %v67 = vunpack.c.l.b16 %v29
  %v68 = vunpack.c.l.b16 %v30
  %v69 = vunpack.c.l.b16 %v31
  %v70 = vunpack.c.l.b16 %v32
  %v71 = vunpack.c.l.b16 %v33
  %v72 = vunpack.c.l.b16 %v34
  %v73 = vunpack.c.l.b16 %v35
  %v74 = vunpack.c.l.b16 %v36
  %v75 = vunpack.c.l.b16 %v37
  %v76 = vunpack.c.l.b16 %v38
  %v77 = vunpack.c.l.b16 %v39
  %v78 = vunpack.c.l.b16 %v40
  %v79 = vunpack.c.l.b16 %v41
  %v80 = vpack.c.b16 %v65, %v64
  %v81 = vpack.c.b16 %v67, %v66
  %v82 = vpack.c.b16 %v69, %v68
  %v83 = vpack.c.b16 %v71, %v70
  %v84 = vpack.c.b16 %v73, %v72
  %v85 = vpack.c.b16 %v75, %v74
  %v86 = vpack.c.b16 %v77, %v76
  %v87 = vpack.c.b16 %v79, %v78
  %96 = vmatprep.subr.bf16.mxu0 0
  %97 = vmatpush1.bf16.msra.mxu0 %v80
  %98 = vmatprep.subr.bf16.mxu0 0
  %99 = vmatpush1.bf16.msra.mxu0 %v81
  %100 = vmatprep.subr.bf16.mxu0 0
  %101 = vmatpush1.bf16.msra.mxu0 %v82
  %102 = vmatprep.subr.bf16.mxu0 0
  %103 = vmatpush1.bf16.msra.mxu0 %v83
  %104 = vmatprep.subr.bf16.mxu0 0
  %105 = vmatpush1.bf16.msra.mxu0 %v84
  %106 = vmatprep.subr.bf16.mxu0 0
  %107 = vmatpush1.bf16.msra.mxu0 %v85
  %108 = vmatprep.subr.bf16.mxu0 0
  %109 = vmatpush1.bf16.msra.mxu0 %v86
  %110 = vmatprep.subr.bf16.mxu0 0
  %111 = vmatpush1.bf16.msra.mxu0 %v87
  %112 = vmatprep.subr.bf16.mxu0 0
  %113 = vmatpush1.bf16.msra.mxu0 0
  %114 = vmatprep.subr.bf16.mxu0 0
  %115 = vmatpush1.bf16.msra.mxu0 0
  %116 = vmatprep.subr.bf16.mxu0 0
  %117 = vmatpush1.bf16.msra.mxu0 0
  %118 = vmatprep.subr.bf16.mxu0 0
  %119 = vmatpush1.bf16.msra.mxu0 0
  %120 = vmatprep.subr.bf16.mxu0 0
  %121 = vmatpush1.bf16.msra.mxu0 0
  %122 = vmatprep.subr.bf16.mxu0 0
  %123 = vmatpush1.bf16.msra.mxu0 0
  %124 = vmatprep.subr.bf16.mxu0 0
  %125 = vmatpush1.bf16.msra.mxu0 0
  %126 = vmatprep.subr.bf16.mxu0 0
  %127 = vmatpush1.bf16.msra.mxu0 0
  %128 = vmatprep.mubr.bf16.mxu0 0
  %129 = vmatmul.mubr.bf16.gmra.mrb[0].mxu0 %v46
  %v130 = vpop.f32.mrb[0].mxu0
  %v131 = vadd.f32 0.0, %v130
  %v132 = vpop.f32.mrb[0].mxu0
  %v133 = vpop.f32.mrb[0].mxu0
  %v134 = vadd.f32 0.0, %v133
  %v135 = vpop.f32.mrb[0].mxu0
  %136 = vdwg.mxu0
  %v137 = vadd.f32 %v22, %v131
  %v138 = vadd.f32 %v23, %v134
  %vm139 = vcmask 261120
  %140 = vst.msk [vmem:[#allocation2] sm:$0xff] %vm139, %v137
  %141 = vst.msk [vmem:[#allocation2 + $0x8] sm:$0xff] %vm139, %v138
  // Predicated region
  $region18: #{gpt_forward.15} parent=0 // pred_check
    %p142 = pneg %p15
  $region19: #{gpt_forward.15} parent=0 // pred_check_branch
    %144 = sbr.rel (%p142) target = $region21
  $region20: #{gpt_forward.15} parent=0 // pred_region
    %v145 = vld [vmem:[%s2] sm:$0xff]
    %v146 = vld [vmem:[%s2 + $0x8] sm:$0xff]
    %v147 = vld [vmem:[#allocation2] sm:$0xff]
    %v148 = vld [vmem:[#allocation2 + $0x8] sm:$0xff]
    %v149 = vmul.f32 %v147, 0.5
    %v150 = vmul.f32 %v148, 0.5
    %v151 = vadd.f32 %v145, %v149
    %v152 = vadd.f32 %v146, %v150
    %153 = vst.msk [vmem:[%s3] sm:$0xff] %vm139, %v151
    %154 = vst.msk [vmem:[%s3 + $0x8] sm:$0xff] %vm139, %v152
  $region21: #{gpt_forward.15} parent=0 // pred_fallthru
    _
  // Predicated region
  $region22: #{gpt_forward.15} parent=0 // pred_check
    _
  $region23: #{gpt_forward.15} parent=0 // pred_check_branch
    %156 = sbr.rel (0) target = $region25
  $region24: #{gpt_forward.15} parent=0 // pred_region
    _
  $region25: #{gpt_forward.15} parent=0 // pred_fallthru
    _
  // Predicated region
  $region26: #{gpt_forward.15} parent=0 // pred_check
    _
  $region27: #{gpt_forward.15} parent=0 // pred_check_branch
    %158 = sbr.rel (0) target = $region29
  $region28: #{gpt_forward.15} parent=0 // pred_region
    _
  $region29: #{gpt_forward.15} parent=0 // pred_fallthru
    _

// kernel: gpt_forward.21
$region0: #{gpt_forward.21}
  #allocation0 [shape = 'u32[]', space=smem, size = 0x4, offset = 0x4, fixed_abs, tag = 'smem constant byte address 0x4 - core index']
  #allocation1 [shape = 'u32[144,128]{1,0:T(1,128)}', space=vmem, size = 0x12000, scoped, tag = 'internal scratch']
  %s0 = inlined_call_operand.vmem [shape: f32[8,32], index: 0, kind: input, shape index: {}]
  %s1 = inlined_call_operand.vmem [shape: f32[1,32], index: 1, kind: input, shape index: {}]
  %s2 = inlined_call_operand.vmem [shape: bf16[256,32], index: 2, kind: input, shape index: {}]
  %s3 = inlined_call_operand.vmem [shape: f32[8,256], index: 3, kind: output, shape index: {}]
  %s4 = sld [smem:[#allocation0]]
  $region22: #{gpt_forward.21} parent=0
    _
  %s6 = ssub.s32 1, %s4
  %s7 = scalar_select 0, %s6, %s4
  // Predicated region
  $region2: #{gpt_forward.21} parent=0 // pred_check
    _
  $region3: #{gpt_forward.21} parent=0 // pred_check_branch
    %9 = sbr.rel (0) target = $region5
  $region4: #{gpt_forward.21} parent=0 // pred_region
    _
  $region5: #{gpt_forward.21} parent=0 // pred_fallthru
    _
  // Predicated region
  $region6: #{gpt_forward.21} parent=0 // pred_check
    _
  $region7: #{gpt_forward.21} parent=0 // pred_check_branch
    %11 = sbr.rel (0) target = $region9
  $region8: #{gpt_forward.21} parent=0 // pred_region
    _
  $region9: #{gpt_forward.21} parent=0 // pred_fallthru
    _
  // Predicated region
  $region10: #{gpt_forward.21} parent=0 // pred_check
    _
  $region11: #{gpt_forward.21} parent=0 // pred_check_branch
    %13 = sbr.rel (0) target = $region13
  $region12: #{gpt_forward.21} parent=0 // pred_region
    _
  $region13: #{gpt_forward.21} parent=0 // pred_fallthru
    _
  %v15 = vld [vmem:[%s0] sm:$0xff]
  %vm16 = vcmask 261120
  %v17 = vsel %vm16, %v15, 0.0
  %18 = vadd.xlane.f32.xlu0 %v17
  %v19 = vpop.xlane.xlu0 %18
  %v20 = vrcp.pop 32.0
  %v21 = vmul.f32 %v19, %v20
  %v22 = vsub.f32 %v15, %v21
  %v23 = vmul.f32 %v22, %v22
  %v24 = vsel %vm16, %v23, 0.0
  %25 = vadd.xlane.f32.xlu0 %v24
  %v26 = vpop.xlane.xlu0 %25
  %v27 = vmul.f32 %v26, %v20
  %v28 = vadd.f32 %v27, 1e-05
  %v29 = vrsqrt.pop %v28
  %v30 = vmul.f32 %v22, %v29
  %v31 = vld [vmem:[%s1] sm:$0x1]
  %v33 = vlaneseq
  %v34 = vshrl.u32 %v33, 7
  %v35 = vsub.s32 0, %v34
  %v36 = vrot.slane %v31, %v35
  %v38 = vmul.f32 %v30, %v36
  %v39 = vpack.c.bf16 %v38, %v38
  %v40 = vld [vmem:[%s2] sm:$0xf]
  %v41 = vld [vmem:[%s2 + $0x4] sm:$0xf]
  %v42 = vld [vmem:[%s2 + $0x8] sm:$0xf]
  %v43 = vld [vmem:[%s2 + $0xc] sm:$0xf]
  %v44 = vld [vmem:[%s2 + $0x10] sm:$0xf]
  %v45 = vld [vmem:[%s2 + $0x14] sm:$0xf]
  %v46 = vld [vmem:[%s2 + $0x18] sm:$0xf]
  %v47 = vld [vmem:[%s2 + $0x1c] sm:$0xf]
  %v48 = vld [vmem:[%s2 + $0x20] sm:$0xf]
  %v49 = vld [vmem:[%s2 + $0x24] sm:$0xf]
  %v50 = vld [vmem:[%s2 + $0x28] sm:$0xf]
  %v51 = vld [vmem:[%s2 + $0x2c] sm:$0xf]
  %v52 = vld [vmem:[%s2 + $0x30] sm:$0xf]
  %v53 = vld [vmem:[%s2 + $0x34] sm:$0xf]
  %v54 = vld [vmem:[%s2 + $0x38] sm:$0xf]
  %v55 = vld [vmem:[%s2 + $0x3c] sm:$0xf]
  %v56 = vld [vmem:[%s2 + $0x40] sm:$0xf]
  %v57 = vld [vmem:[%s2 + $0x44] sm:$0xf]
  %v58 = vld [vmem:[%s2 + $0x48] sm:$0xf]
  %v59 = vld [vmem:[%s2 + $0x4c] sm:$0xf]
  %v60 = vld [vmem:[%s2 + $0x50] sm:$0xf]
  %v61 = vld [vmem:[%s2 + $0x54] sm:$0xf]
  %v62 = vld [vmem:[%s2 + $0x58] sm:$0xf]
  %v63 = vld [vmem:[%s2 + $0x5c] sm:$0xf]
  %v64 = vld [vmem:[%s2 + $0x60] sm:$0xf]
  %v65 = vld [vmem:[%s2 + $0x64] sm:$0xf]
  %v66 = vld [vmem:[%s2 + $0x68] sm:$0xf]
  %v67 = vld [vmem:[%s2 + $0x6c] sm:$0xf]
  %v68 = vld [vmem:[%s2 + $0x70] sm:$0xf]
  %v69 = vld [vmem:[%s2 + $0x74] sm:$0xf]
  %v70 = vld [vmem:[%s2 + $0x78] sm:$0xf]
  %v71 = vld [vmem:[%s2 + $0x7c] sm:$0xf]
  %v104 = vunpack.c.l.b16 %v40
  %v105 = vunpack.c.l.b16 %v41
  %v106 = vunpack.c.l.b16 %v42
  %v107 = vunpack.c.l.b16 %v43
  %v108 = vunpack.c.l.b16 %v44
  %v109 = vunpack.c.l.b16 %v45
  %v110 = vunpack.c.l.b16 %v46
  %v111 = vunpack.c.l.b16 %v47
  %v112 = vunpack.c.l.b16 %v48
  %v113 = vunpack.c.l.b16 %v49
  %v114 = vunpack.c.l.b16 %v50
  %v115 = vunpack.c.l.b16 %v51
  %v116 = vunpack.c.l.b16 %v52
  %v117 = vunpack.c.l.b16 %v53
  %v118 = vunpack.c.l.b16 %v54
  %v119 = vunpack.c.l.b16 %v55
  %v120 = vunpack.c.l.b16 %v56
  %v121 = vunpack.c.l.b16 %v57
  %v122 = vunpack.c.l.b16 %v58
  %v123 = vunpack.c.l.b16 %v59
  %v124 = vunpack.c.l.b16 %v60
  %v125 = vunpack.c.l.b16 %v61
  %v126 = vunpack.c.l.b16 %v62
  %v127 = vunpack.c.l.b16 %v63
  %v128 = vunpack.c.l.b16 %v64
  %v129 = vunpack.c.l.b16 %v65
  %v130 = vunpack.c.l.b16 %v66
  %v131 = vunpack.c.l.b16 %v67
  %v132 = vunpack.c.l.b16 %v68
  %v133 = vunpack.c.l.b16 %v69
  %v134 = vunpack.c.l.b16 %v70
  %v135 = vunpack.c.l.b16 %v71
  %v136 = vpack.c.b16 %v105, %v104
  %v137 = vpack.c.b16 %v107, %v106
  %v138 = vpack.c.b16 %v109, %v108
  %v139 = vpack.c.b16 %v111, %v110
  %v140 = vpack.c.b16 %v113, %v112
  %v141 = vpack.c.b16 %v115, %v114
  %v142 = vpack.c.b16 %v117, %v116
  %v143 = vpack.c.b16 %v119, %v118
  %v144 = vpack.c.b16 %v121, %v120
  %v145 = vpack.c.b16 %v123, %v122
  %v146 = vpack.c.b16 %v125, %v124
  %v147 = vpack.c.b16 %v127, %v126
  %v148 = vpack.c.b16 %v129, %v128
  %v149 = vpack.c.b16 %v131, %v130
  %v150 = vpack.c.b16 %v133, %v132
  %v151 = vpack.c.b16 %v135, %v134
  %v153 = vsel %vm16, %v39, 0
  %v156 = vsel %vm16, %v136, 0
  %v159 = vsel %vm16, %v137, 0
  %v162 = vsel %vm16, %v138, 0
  %v165 = vsel %vm16, %v139, 0
  %v168 = vsel %vm16, %v140, 0
  %v171 = vsel %vm16, %v141, 0
  %v174 = vsel %vm16, %v142, 0
  %v177 = vsel %vm16, %v143, 0
  %v180 = vsel %vm16, %v144, 0
  %v183 = vsel %vm16, %v145, 0
  %v186 = vsel %vm16, %v146, 0
  %v189 = vsel %vm16, %v147, 0
  %v192 = vsel %vm16, %v148, 0
  %v195 = vsel %vm16, %v149, 0
  %v198 = vsel %vm16, %v150, 0
  %v201 = vsel %vm16, %v151, 0
  %203 = vmatprep.subr.bf16.mxu0 0
  %204 = vmatpush1.bf16.xpose.msra.mxu0 %v156
  %205 = vmatprep.subr.bf16.mxu0 0
  %206 = vmatpush1.bf16.xpose.msra.mxu0 %v159
  %207 = vmatprep.subr.bf16.mxu0 0
  %208 = vmatpush1.bf16.xpose.msra.mxu0 %v162
  %209 = vmatprep.subr.bf16.mxu0 0
  %210 = vmatpush1.bf16.xpose.msra.mxu0 %v165
  %211 = vmatprep.subr.bf16.mxu0 0
  %212 = vmatpush1.bf16.xpose.msra.mxu0 %v168
  %213 = vmatprep.subr.bf16.mxu0 0
  %214 = vmatpush1.bf16.xpose.msra.mxu0 %v171
  %215 = vmatprep.subr.bf16.mxu0 0
  %216 = vmatpush1.bf16.xpose.msra.mxu0 %v174
  %217 = vmatprep.subr.bf16.mxu0 0
  %218 = vmatpush1.bf16.xpose.msra.mxu0 %v177
  %219 = vmatprep.subr.bf16.mxu0 0
  %220 = vmatpush1.bf16.xpose.msra.mxu0 %v180
  %221 = vmatprep.subr.bf16.mxu0 0
  %222 = vmatpush1.bf16.xpose.msra.mxu0 %v183
  %223 = vmatprep.subr.bf16.mxu0 0
  %224 = vmatpush1.bf16.xpose.msra.mxu0 %v186
  %225 = vmatprep.subr.bf16.mxu0 0
  %226 = vmatpush1.bf16.xpose.msra.mxu0 %v189
  %227 = vmatprep.subr.bf16.mxu0 0
  %228 = vmatpush1.bf16.xpose.msra.mxu0 %v192
  %229 = vmatprep.subr.bf16.mxu0 0
  %230 = vmatpush1.bf16.xpose.msra.mxu0 %v195
  %231 = vmatprep.subr.bf16.mxu0 0
  %232 = vmatpush1.bf16.xpose.msra.mxu0 %v198
  %233 = vmatprep.subr.bf16.mxu0 0
  %234 = vmatpush1.bf16.xpose.msra.mxu0 %v201
  %235 = vmatprep.mubr.bf16.mxu0 0
  %236 = vmatmul.mubr.bf16.gmra.mrb[0].mxu0 %v153
  %v237 = vpop.f32.mrb[0].mxu0
  %v238 = vadd.f32 0.0, %v237
  %v239 = vpop.f32.mrb[0].mxu0
  %v240 = vadd.f32 0.0, %v239
  %v241 = vpop.f32.mrb[0].mxu0
  %v242 = vpop.f32.mrb[0].mxu0
  %243 = vdwg.mxu0
  %244 = vst [vmem:[%s3] sm:$0xff] %v238
  %245 = vst [vmem:[%s3 + $0x8] sm:$0xff] %v240
  // Predicated region
  $region14: #{gpt_forward.21} parent=0 // pred_check
    _
  $region15: #{gpt_forward.21} parent=0 // pred_check_branch
    %247 = sbr.rel (0) target = $region17
  $region16: #{gpt_forward.21} parent=0 // pred_region
    _
  $region17: #{gpt_forward.21} parent=0 // pred_fallthru
    _
  // Predicated region
  $region18: #{gpt_forward.21} parent=0 // pred_check
    _
  $region19: #{gpt_forward.21} parent=0 // pred_check_branch
    %249 = sbr.rel (0) target = $region21
  $region20: #{gpt_forward.21} parent=0 // pred_region
    _
  $region21: #{gpt_forward.21} parent=0 // pred_fallthru
    _

</llo_original>
